<compile_context>
chip_gen: v6e
topology: v6e:2x2x1
jax: 0.10.0
libtpu: 0.0.40
codegen_flags: <defaults>
</compile_context>

<pallas_src>
import math

import jax
import jax.numpy as jnp
from jax.experimental import pallas as pl
from jax.experimental.pallas import tpu as pltpu


def _round_up(x, m):
    return ((x + m - 1) // m) * m


# ----------------------------------------------------------------------------
# Kernel
# ----------------------------------------------------------------------------
def _vae_kernel(x_ref, w1_ref, b1_ref, wml_ref, bml_ref, eps_ref,
                dw1_ref, db1_ref, dw2_ref, db2_ref,
                recon_ref, mulv_ref):
    L = eps_ref.shape[-1]
    bf16 = jnp.bfloat16

    # ---- Encoder: linear1 + ReLU (bf16 MXU operands, f32 accumulate) ----
    h = jnp.dot(x_ref[...], w1_ref[...], preferred_element_type=jnp.float32)
    h = jnp.maximum(h + b1_ref[...], 0.0)

    # ---- Fused mu/log_var head: one lane-dense (H, 128) matmul ----
    mulv = jnp.dot(h.astype(bf16), wml_ref[...],
                   preferred_element_type=jnp.float32) + bml_ref[...]
    mu = mulv[:, :L]
    log_var = mulv[:, L:2 * L]

    # ---- Reparameterize: z = mu + exp(0.5 * log_var) * eps   (f32 VPU/EUP) --
    z = mu + jnp.exp(0.5 * log_var) * eps_ref[...]

    # ---- Decoder: linear1 + ReLU ----
    hd = jnp.dot(z.astype(bf16), dw1_ref[...],
                 preferred_element_type=jnp.float32)
    hd = jnp.maximum(hd + db1_ref[...], 0.0)

    # ---- Decoder: linear2 + sigmoid (exp -> EUP, approx recip -> EUP) ----
    logits = jnp.dot(hd.astype(bf16), dw2_ref[...],
                     preferred_element_type=jnp.float32) + db2_ref[...]
    recon = pl.reciprocal(1.0 + jnp.exp(-logits), approx=True)

    recon_ref[...] = recon.astype(recon_ref.dtype)
    mulv_ref[...] = mulv.astype(mulv_ref.dtype)


# ----------------------------------------------------------------------------
# Wrapper helpers
# ----------------------------------------------------------------------------
def _default_batch_tile():
    """128 on v4/v5* (4x128 MXU, 16 MiB scoped VMEM), 256 on v6e / v7x."""
    try:
        kind = jax.devices()[0].device_kind.lower()
    except Exception:
        return 256
    return 256 if ("v6" in kind or "v7" in kind) else 128


def _pick_batch_tile(B, cap):
    """Pick TB avoiding wrapper-side padding when possible."""
    if B <= cap:
        return B, B                      # full-dim block: always legal
    cap8 = cap - (cap % 8)
    for t in range(cap8, 7, -8):         # largest divisor of B, multiple of 8
        if B % t == 0:
            return t, B
    return cap8, _round_up(B, cap8)      # fall back to padding


def _vmem_limit_bytes(TB, F, L, HEAD, params, recon_dtype, single_buffer_w):
    """Shape-derived VMEM limit: pipelined activation blocks + weights."""
    recon_b = jnp.dtype(recon_dtype).itemsize
    act = TB * F * 2 * 2          # x block (bf16), double-buffered
    act += TB * L * 4 * 2         # eps block (f32)
    act += TB * F * recon_b * 2   # reconstruction block
    act += TB * HEAD * 4 * 2      # mulv block
    wbytes = sum(int(v.size * v.dtype.itemsize) for v in params.values())
    act += wbytes * (1 if single_buffer_w else 2)
    limit = int(act * 1.5) + (2 << 20)    # headroom for compiler scratch
    return int(max(min(limit, 64 << 20), 16 << 20))


# ----------------------------------------------------------------------------
# Forward pass
# ----------------------------------------------------------------------------
def vae_forward(x, params, eps, *, batch_tile=None, recon_dtype=jnp.float32):
    """x: (B, ...) flattened from dim 1. Returns (reconstruction, mu, log_var)."""
    B = x.shape[0]
    x2d = x.reshape(B, -1).astype(jnp.bfloat16)     # pre-cast: halve x DMA bytes
    F = x2d.shape[1]
    L = eps.shape[1]
    HEAD = params["enc_wml"].shape[1]               # lane-padded 2L (>=128)

    cap = batch_tile if batch_tile is not None else _default_batch_tile()
    TB, Bp = _pick_batch_tile(B, cap)

    eps_f32 = eps.astype(jnp.float32)
    if Bp != B:
        pad = Bp - B
        x2d = jnp.pad(x2d, ((0, pad), (0, 0)))
        eps_f32 = jnp.pad(eps_f32, ((0, pad), (0, 0)))

    grid = (Bp // TB,)

    def batch_spec(cols):
        return pl.BlockSpec((TB, cols), lambda i: (i, 0))

    def const_spec(shape, single_buffer):
        if single_buffer:
            # Constant index_map -> weights never change; no double-buffer.
            return pl.BlockSpec(shape, lambda i: (0, 0),
                                pipeline_mode=pl.Buffered(1))
        return pl.BlockSpec(shape, lambda i: (0, 0))

    args = (x2d,
            params["enc_w1"], params["enc_b1"],
            params["enc_wml"], params["enc_bml"],
            eps_f32,
            params["dec_w1"], params["dec_b1"],
            params["dec_w2"], params["dec_b2"])

    out_shapes = (jax.ShapeDtypeStruct((Bp, F), recon_dtype),
                  jax.ShapeDtypeStruct((Bp, HEAD), jnp.float32))
    out_specs = (batch_spec(F), batch_spec(HEAD))

    # TODO(synk): for image-scale num_features on v7x (64 MiB VMEM), add a
    # second "arbitrary" grid axis tiling F with an f32 accumulator scratch;
    # whole-F blocks are kept here because these shapes fit VMEM comfortably.
    def build(single_buffer_weights):
        in_specs = [
            batch_spec(F),
            const_spec(params["enc_w1"].shape, single_buffer_weights),
            const_spec(params["enc_b1"].shape, single_buffer_weights),
            const_spec(params["enc_wml"].shape, single_buffer_weights),
            const_spec(params["enc_bml"].shape, single_buffer_weights),
            batch_spec(L),
            const_spec(params["dec_w1"].shape, single_buffer_weights),
            const_spec(params["dec_b1"].shape, single_buffer_weights),
            const_spec(params["dec_w2"].shape, single_buffer_weights),
            const_spec(params["dec_b2"].shape, single_buffer_weights),
        ]
        return pl.pallas_call(
            _vae_kernel,
            out_shape=out_shapes,
            grid=grid,
            in_specs=in_specs,
            out_specs=out_specs,
            compiler_params=pltpu.CompilerParams(
                dimension_semantics=("parallel",),
                vmem_limit_bytes=_vmem_limit_bytes(
                    TB, F, L, HEAD, params, recon_dtype,
                    single_buffer_weights)),
        )

    try:
        recon, mulv = build(True)(*args)
    except Exception:
        # Fallback if this jax/mosaic version rejects Buffered(1) on constant
        # blocks: default double-buffered weights (correct, slightly more VMEM).
        recon, mulv = build(False)(*args)

    recon = recon[:B].astype(jnp.float32)
    mu = mulv[:B, :L]
    log_var = mulv[:B, L:2 * L]
    return recon, mu, log_var


# ----------------------------------------------------------------------------
# Parameter init (PyTorch nn.Linear-style uniform(-1/sqrt(fan_in), ...))
# ----------------------------------------------------------------------------
def init_params(key, latent_dims, num_features, hidden_features):
    """Weights stored (in, out) bf16; biases (1, out) f32.

    The mu / log_var heads are fused into one weight slab and zero-padded to a
    lane-dense width (multiple of 128): columns [:L] = mu, [L:2L] = log_var.
    """
    def linear(k, fan_in, fan_out):
        kw, kb = jax.random.split(k)
        bound = 1.0 / math.sqrt(fan_in)
        w = jax.random.uniform(kw, (fan_in, fan_out), jnp.float32, -bound, bound)
        b = jax.random.uniform(kb, (1, fan_out), jnp.float32, -bound, bound)
        return w, b

    k1, k2, k3, k4, k5 = jax.random.split(key, 5)
    enc_w1, enc_b1 = linear(k1, num_features, hidden_features)
    wmu, bmu = linear(k2, hidden_features, latent_dims)
    wlv, blv = linear(k3, hidden_features, latent_dims)
    dec_w1, dec_b1 = linear(k4, latent_dims, hidden_features)
    dec_w2, dec_b2 = linear(k5, hidden_features, num_features)

    L = latent_dims
    head = _round_up(2 * L, 128)
    wml = jnp.zeros((hidden_features, head), jnp.float32)
    wml = wml.at[:, :L].set(wmu).at[:, L:2 * L].set(wlv)
    bml = jnp.zeros((1, head), jnp.float32)
    bml = bml.at[:, :L].set(bmu).at[:, L:2 * L].set(blv)

    bf16 = jnp.bfloat16
    return dict(
        enc_w1=enc_w1.astype(bf16), enc_b1=enc_b1,
        enc_wml=wml.astype(bf16), enc_bml=bml,
        dec_w1=dec_w1.astype(bf16), dec_b1=dec_b1,
        dec_w2=dec_w2.astype(bf16), dec_b2=dec_b2,
    )


if __name__ == "__main__":
    key = jax.random.PRNGKey(0)
    k_params, k_x, k_eps = jax.random.split(key, 3)

    # Small, VAE-consistent shapes.
    latent_dims = 32
    hidden_features = 128
    B = 8
    # Input is multi-dim and gets flattened from dim 1 (torch.flatten(x, 1)).
    x = jax.random.normal(k_x, (B, 4, 64), jnp.float32)   # num_features = 256
    num_features = 4 * 64

    params = init_params(k_params, latent_dims, num_features, hidden_features)
    eps = jax.random.normal(k_eps, (B, latent_dims), jnp.float32)

    recon, mu, log_var = vae_forward(x, params, eps)
    jax.block_until_ready((recon, mu, log_var))

    # Pure-JAX reference with the same bf16 MXU operands / f32 accumulation.
    f32 = jnp.float32
    bf = lambda a: a.astype(jnp.bfloat16)
    x2d = bf(x.reshape(B, -1))
    h = jax.nn.relu(jnp.dot(x2d, params["enc_w1"],
                            preferred_element_type=f32) + params["enc_b1"])
    mulv = jnp.dot(bf(h), params["enc_wml"],
                   preferred_element_type=f32) + params["enc_bml"]
    mu_ref = mulv[:, :latent_dims]
    lv_ref = mulv[:, latent_dims:2 * latent_dims]
    z = mu_ref + jnp.exp(0.5 * lv_ref) * eps
    hd = jax.nn.relu(jnp.dot(bf(z), params["dec_w1"],
                             preferred_element_type=f32) + params["dec_b1"])
    logits = jnp.dot(bf(hd), params["dec_w2"],
                     preferred_element_type=f32) + params["dec_b2"]
    recon_ref = jax.nn.sigmoid(logits)

    # bf16 matmuls + approx reciprocal in the kernel -> moderate tolerance.
    assert jnp.allclose(recon, recon_ref, atol=1e-2, rtol=1e-2)
    assert jnp.allclose(mu, mu_ref, atol=1e-2, rtol=1e-2)
    assert jnp.allclose(log_var, lv_ref, atol=1e-2, rtol=1e-2)

    print("KERNEL_OK")
</pallas_src>

<mosaic_0001>
module attributes {stable_mosaic.version = 11 : i64} {
  func.func @_vae_kernel(%arg0: i32, %arg1: memref<8x256xbf16, #tpu.memory_space<vmem>>, %arg2: memref<256x128xbf16, #tpu.memory_space<vmem>>, %arg3: memref<1x128xf32, #tpu.memory_space<vmem>>, %arg4: memref<128x128xbf16, #tpu.memory_space<vmem>>, %arg5: memref<1x128xf32, #tpu.memory_space<vmem>>, %arg6: memref<8x32xf32, #tpu.memory_space<vmem>>, %arg7: memref<32x128xbf16, #tpu.memory_space<vmem>>, %arg8: memref<1x128xf32, #tpu.memory_space<vmem>>, %arg9: memref<128x256xbf16, #tpu.memory_space<vmem>>, %arg10: memref<1x256xf32, #tpu.memory_space<vmem>>, %arg11: memref<8x256xf32, #tpu.memory_space<vmem>>, %arg12: memref<8x128xf32, #tpu.memory_space<vmem>>) attributes {dimension_semantics = [#tpu.dimension_semantics<parallel>], iteration_bounds = array<i64: 1>, scalar_prefetch = 0 : i64, scratch_operands = 0 : i64, tpu.core_type = #tpu.core_type<tc>, window_params = [{transform_indices = @transform_0, window_bounds = array<i64: 8, 256>}, {pipeline_mode = #tpu.pipeline_mode<synchronous>, transform_indices = @transform_1, window_bounds = array<i64: 256, 128>}, {pipeline_mode = #tpu.pipeline_mode<synchronous>, transform_indices = @transform_2, window_bounds = array<i64: 1, 128>}, {pipeline_mode = #tpu.pipeline_mode<synchronous>, transform_indices = @transform_3, window_bounds = array<i64: 128, 128>}, {pipeline_mode = #tpu.pipeline_mode<synchronous>, transform_indices = @transform_4, window_bounds = array<i64: 1, 128>}, {transform_indices = @transform_5, window_bounds = array<i64: 8, 32>}, {pipeline_mode = #tpu.pipeline_mode<synchronous>, transform_indices = @transform_6, window_bounds = array<i64: 32, 128>}, {pipeline_mode = #tpu.pipeline_mode<synchronous>, transform_indices = @transform_7, window_bounds = array<i64: 1, 128>}, {pipeline_mode = #tpu.pipeline_mode<synchronous>, transform_indices = @transform_8, window_bounds = array<i64: 128, 256>}, {pipeline_mode = #tpu.pipeline_mode<synchronous>, transform_indices = @transform_9, window_bounds = array<i64: 1, 256>}, {transform_indices = @transform_10, window_bounds = array<i64: 8, 256>}, {transform_indices = @transform_11, window_bounds = array<i64: 8, 128>}]} {
    %c0 = arith.constant 0 : index
    %c0_0 = arith.constant 0 : index
    %0 = vector.load %arg1[%c0, %c0_0] : memref<8x256xbf16, #tpu.memory_space<vmem>>, vector<8x256xbf16>
    %c0_1 = arith.constant 0 : index
    %c0_2 = arith.constant 0 : index
    %1 = vector.load %arg2[%c0_1, %c0_2] : memref<256x128xbf16, #tpu.memory_space<vmem>>, vector<256x128xbf16>
    %cst = arith.constant dense<0.000000e+00> : vector<8x128xf32>
    %2 = tpu.matmul %0, %1, %cst {dimension_numbers = #tpu.dot_dimension_numbers<[1], [0], [0], [1], [0, 0, 1, 1], [], []>} : vector<8x256xbf16>, vector<256x128xbf16>, vector<8x128xf32> -> vector<8x128xf32>
    %c0_3 = arith.constant 0 : index
    %c0_4 = arith.constant 0 : index
    %3 = vector.load %arg3[%c0_3, %c0_4] : memref<1x128xf32, #tpu.memory_space<vmem>>, vector<1x128xf32>
    %4 = vector.broadcast %3 : vector<1x128xf32> to vector<8x128xf32>
    %5 = arith.addf %2, %4 : vector<8x128xf32>
    %cst_5 = arith.constant 0.000000e+00 : f32
    %6 = vector.broadcast %cst_5 : f32 to vector<8x128xf32>
    %7 = arith.maximumf %5, %6 : vector<8x128xf32>
    %8 = arith.truncf %7 : vector<8x128xf32> to vector<8x128xbf16>
    %c0_6 = arith.constant 0 : index
    %c0_7 = arith.constant 0 : index
    %9 = vector.load %arg4[%c0_6, %c0_7] : memref<128x128xbf16, #tpu.memory_space<vmem>>, vector<128x128xbf16>
    %cst_8 = arith.constant dense<0.000000e+00> : vector<8x128xf32>
    %10 = tpu.matmul %8, %9, %cst_8 {dimension_numbers = #tpu.dot_dimension_numbers<[1], [0], [0], [1], [0, 0, 1, 1], [], []>} : vector<8x128xbf16>, vector<128x128xbf16>, vector<8x128xf32> -> vector<8x128xf32>
    %c0_9 = arith.constant 0 : index
    %c0_10 = arith.constant 0 : index
    %11 = vector.load %arg5[%c0_9, %c0_10] : memref<1x128xf32, #tpu.memory_space<vmem>>, vector<1x128xf32>
    %12 = vector.broadcast %11 : vector<1x128xf32> to vector<8x128xf32>
    %13 = arith.addf %10, %12 : vector<8x128xf32>
    %14 = vector.extract_strided_slice %13 {offsets = [0, 0], sizes = [8, 32], strides = [1, 1]} : vector<8x128xf32> to vector<8x32xf32>
    %15 = vector.extract_strided_slice %13 {offsets = [0, 32], sizes = [8, 32], strides = [1, 1]} : vector<8x128xf32> to vector<8x32xf32>
    %cst_11 = arith.constant 5.000000e-01 : f32
    %16 = vector.broadcast %cst_11 : f32 to vector<8x32xf32>
    %17 = arith.mulf %16, %15 : vector<8x32xf32>
    %18 = math.exp %17 : vector<8x32xf32>
    %c0_12 = arith.constant 0 : index
    %c0_13 = arith.constant 0 : index
    %19 = vector.load %arg6[%c0_12, %c0_13] : memref<8x32xf32, #tpu.memory_space<vmem>>, vector<8x32xf32>
    %20 = arith.mulf %18, %19 : vector<8x32xf32>
    %21 = arith.addf %14, %20 : vector<8x32xf32>
    %22 = arith.truncf %21 : vector<8x32xf32> to vector<8x32xbf16>
    %c0_14 = arith.constant 0 : index
    %c0_15 = arith.constant 0 : index
    %23 = vector.load %arg7[%c0_14, %c0_15] : memref<32x128xbf16, #tpu.memory_space<vmem>>, vector<32x128xbf16>
    %cst_16 = arith.constant dense<0.000000e+00> : vector<8x128xf32>
    %24 = tpu.matmul %22, %23, %cst_16 {dimension_numbers = #tpu.dot_dimension_numbers<[1], [0], [0], [1], [0, 0, 1, 1], [], []>} : vector<8x32xbf16>, vector<32x128xbf16>, vector<8x128xf32> -> vector<8x128xf32>
    %c0_17 = arith.constant 0 : index
    %c0_18 = arith.constant 0 : index
    %25 = vector.load %arg8[%c0_17, %c0_18] : memref<1x128xf32, #tpu.memory_space<vmem>>, vector<1x128xf32>
    %26 = vector.broadcast %25 : vector<1x128xf32> to vector<8x128xf32>
    %27 = arith.addf %24, %26 : vector<8x128xf32>
    %cst_19 = arith.constant 0.000000e+00 : f32
    %28 = vector.broadcast %cst_19 : f32 to vector<8x128xf32>
    %29 = arith.maximumf %27, %28 : vector<8x128xf32>
    %30 = arith.truncf %29 : vector<8x128xf32> to vector<8x128xbf16>
    %c0_20 = arith.constant 0 : index
    %c0_21 = arith.constant 0 : index
    %31 = vector.load %arg9[%c0_20, %c0_21] : memref<128x256xbf16, #tpu.memory_space<vmem>>, vector<128x256xbf16>
    %cst_22 = arith.constant dense<0.000000e+00> : vector<8x256xf32>
    %32 = tpu.matmul %30, %31, %cst_22 {dimension_numbers = #tpu.dot_dimension_numbers<[1], [0], [0], [1], [0, 0, 1, 1], [], []>} : vector<8x128xbf16>, vector<128x256xbf16>, vector<8x256xf32> -> vector<8x256xf32>
    %c0_23 = arith.constant 0 : index
    %c0_24 = arith.constant 0 : index
    %33 = vector.load %arg10[%c0_23, %c0_24] : memref<1x256xf32, #tpu.memory_space<vmem>>, vector<1x256xf32>
    %34 = vector.broadcast %33 : vector<1x256xf32> to vector<8x256xf32>
    %35 = arith.addf %32, %34 : vector<8x256xf32>
    %cst_25 = arith.constant 0.000000e+00 : f32
    %36 = vector.broadcast %cst_25 : f32 to vector<8x256xf32>
    %37 = arith.subf %36, %35 : vector<8x256xf32>
    %38 = math.exp %37 : vector<8x256xf32>
    %cst_26 = arith.constant 1.000000e+00 : f32
    %39 = vector.broadcast %cst_26 : f32 to vector<8x256xf32>
    %40 = arith.addf %39, %38 : vector<8x256xf32>
    %41 = tpu.reciprocal %40 {approx = true} : vector<8x256xf32> -> vector<8x256xf32>
    %c0_27 = arith.constant 0 : index
    %c0_28 = arith.constant 0 : index
    %42 = vector.load %arg11[%c0_27, %c0_28] : memref<8x256xf32, #tpu.memory_space<vmem>>, vector<8x256xf32>
    tpu.vector_store %arg11[%c0_27, %c0_28], %41 {strides = array<i32>} : memref<8x256xf32, #tpu.memory_space<vmem>>, vector<8x256xf32>,
    %c0_29 = arith.constant 0 : index
    %c0_30 = arith.constant 0 : index
    %43 = vector.load %arg12[%c0_29, %c0_30] : memref<8x128xf32, #tpu.memory_space<vmem>>, vector<8x128xf32>
    tpu.vector_store %arg12[%c0_29, %c0_30], %13 {strides = array<i32>} : memref<8x128xf32, #tpu.memory_space<vmem>>, vector<8x128xf32>,
    return
  }
  func.func @transform_0(%arg0: i32) -> (i32, i32) {
    %c0_i32 = arith.constant 0 : i32
    %c0_i32_0 = arith.constant 0 : i32
    return %arg0, %c0_i32 : i32, i32
  }
  func.func @transform_1(%arg0: i32) -> (i32, i32) {
    %c0_i32 = arith.constant 0 : i32
    %c0_i32_0 = arith.constant 0 : i32
    %c0_i32_1 = arith.constant 0 : i32
    return %c0_i32, %c0_i32_0 : i32, i32
  }
  func.func @transform_2(%arg0: i32) -> (i32, i32) {
    %c0_i32 = arith.constant 0 : i32
    %c0_i32_0 = arith.constant 0 : i32
    %c0_i32_1 = arith.constant 0 : i32
    return %c0_i32, %c0_i32_0 : i32, i32
  }
  func.func @transform_3(%arg0: i32) -> (i32, i32) {
    %c0_i32 = arith.constant 0 : i32
    %c0_i32_0 = arith.constant 0 : i32
    %c0_i32_1 = arith.constant 0 : i32
    return %c0_i32, %c0_i32_0 : i32, i32
  }
  func.func @transform_4(%arg0: i32) -> (i32, i32) {
    %c0_i32 = arith.constant 0 : i32
    %c0_i32_0 = arith.constant 0 : i32
    %c0_i32_1 = arith.constant 0 : i32
    return %c0_i32, %c0_i32_0 : i32, i32
  }
  func.func @transform_5(%arg0: i32) -> (i32, i32) {
    %c0_i32 = arith.constant 0 : i32
    %c0_i32_0 = arith.constant 0 : i32
    return %arg0, %c0_i32 : i32, i32
  }
  func.func @transform_6(%arg0: i32) -> (i32, i32) {
    %c0_i32 = arith.constant 0 : i32
    %c0_i32_0 = arith.constant 0 : i32
    %c0_i32_1 = arith.constant 0 : i32
    return %c0_i32, %c0_i32_0 : i32, i32
  }
  func.func @transform_7(%arg0: i32) -> (i32, i32) {
    %c0_i32 = arith.constant 0 : i32
    %c0_i32_0 = arith.constant 0 : i32
    %c0_i32_1 = arith.constant 0 : i32
    return %c0_i32, %c0_i32_0 : i32, i32
  }
  func.func @transform_8(%arg0: i32) -> (i32, i32) {
    %c0_i32 = arith.constant 0 : i32
    %c0_i32_0 = arith.constant 0 : i32
    %c0_i32_1 = arith.constant 0 : i32
    return %c0_i32, %c0_i32_0 : i32, i32
  }
  func.func @transform_9(%arg0: i32) -> (i32, i32) {
    %c0_i32 = arith.constant 0 : i32
    %c0_i32_0 = arith.constant 0 : i32
    %c0_i32_1 = arith.constant 0 : i32
    return %c0_i32, %c0_i32_0 : i32, i32
  }
  func.func @transform_10(%arg0: i32) -> (i32, i32) {
    %c0_i32 = arith.constant 0 : i32
    %c0_i32_0 = arith.constant 0 : i32
    return %arg0, %c0_i32 : i32, i32
  }
  func.func @transform_11(%arg0: i32) -> (i32, i32) {
    %c0_i32 = arith.constant 0 : i32
    %c0_i32_0 = arith.constant 0 : i32
    return %arg0, %c0_i32 : i32, i32
  }
}

module attributes {stable_mosaic.version = 11 : i64} {
  func.func @_vae_kernel(%arg0: i32, %arg1: memref<8x256xbf16, #tpu.memory_space<vmem>>, %arg2: memref<256x128xbf16, #tpu.memory_space<vmem>>, %arg3: memref<1x128xf32, #tpu.memory_space<vmem>>, %arg4: memref<128x128xbf16, #tpu.memory_space<vmem>>, %arg5: memref<1x128xf32, #tpu.memory_space<vmem>>, %arg6: memref<8x32xf32, #tpu.memory_space<vmem>>, %arg7: memref<32x128xbf16, #tpu.memory_space<vmem>>, %arg8: memref<1x128xf32, #tpu.memory_space<vmem>>, %arg9: memref<128x256xbf16, #tpu.memory_space<vmem>>, %arg10: memref<1x256xf32, #tpu.memory_space<vmem>>, %arg11: memref<8x256xf32, #tpu.memory_space<vmem>>, %arg12: memref<8x128xf32, #tpu.memory_space<vmem>>) attributes {dimension_semantics = [#tpu.dimension_semantics<parallel>], iteration_bounds = array<i64: 1>, scalar_prefetch = 0 : i64, scratch_operands = 0 : i64, tpu.core_type = #tpu.core_type<tc>, window_params = [{transform_indices = @transform_0, window_bounds = array<i64: 8, 256>}, {pipeline_mode = #tpu.pipeline_mode<synchronous>, transform_indices = @transform_1, window_bounds = array<i64: 256, 128>}, {pipeline_mode = #tpu.pipeline_mode<synchronous>, transform_indices = @transform_2, window_bounds = array<i64: 1, 128>}, {pipeline_mode = #tpu.pipeline_mode<synchronous>, transform_indices = @transform_3, window_bounds = array<i64: 128, 128>}, {pipeline_mode = #tpu.pipeline_mode<synchronous>, transform_indices = @transform_4, window_bounds = array<i64: 1, 128>}, {transform_indices = @transform_5, window_bounds = array<i64: 8, 32>}, {pipeline_mode = #tpu.pipeline_mode<synchronous>, transform_indices = @transform_6, window_bounds = array<i64: 32, 128>}, {pipeline_mode = #tpu.pipeline_mode<synchronous>, transform_indices = @transform_7, window_bounds = array<i64: 1, 128>}, {pipeline_mode = #tpu.pipeline_mode<synchronous>, transform_indices = @transform_8, window_bounds = array<i64: 128, 256>}, {pipeline_mode = #tpu.pipeline_mode<synchronous>, transform_indices = @transform_9, window_bounds = array<i64: 1, 256>}, {transform_indices = @transform_10, window_bounds = array<i64: 8, 256>}, {transform_indices = @transform_11, window_bounds = array<i64: 8, 128>}]} {
    %c0 = arith.constant 0 : index
    %c0_0 = arith.constant 0 : index
    %0 = vector.load %arg1[%c0, %c0_0] : memref<8x256xbf16, #tpu.memory_space<vmem>>, vector<8x256xbf16>
    %c0_1 = arith.constant 0 : index
    %c0_2 = arith.constant 0 : index
    %1 = vector.load %arg2[%c0_1, %c0_2] : memref<256x128xbf16, #tpu.memory_space<vmem>>, vector<256x128xbf16>
    %cst = arith.constant dense<0.000000e+00> : vector<8x128xf32>
    %2 = tpu.matmul %0, %1, %cst {dimension_numbers = #tpu.dot_dimension_numbers<[1], [0], [0], [1], [0, 0, 1, 1], [], []>} : vector<8x256xbf16>, vector<256x128xbf16>, vector<8x128xf32> -> vector<8x128xf32>
    %c0_3 = arith.constant 0 : index
    %c0_4 = arith.constant 0 : index
    %3 = vector.load %arg3[%c0_3, %c0_4] : memref<1x128xf32, #tpu.memory_space<vmem>>, vector<1x128xf32>
    %4 = vector.broadcast %3 : vector<1x128xf32> to vector<8x128xf32>
    %5 = arith.addf %2, %4 : vector<8x128xf32>
    %cst_5 = arith.constant 0.000000e+00 : f32
    %6 = vector.broadcast %cst_5 : f32 to vector<8x128xf32>
    %7 = arith.maximumf %5, %6 : vector<8x128xf32>
    %8 = arith.truncf %7 : vector<8x128xf32> to vector<8x128xbf16>
    %c0_6 = arith.constant 0 : index
    %c0_7 = arith.constant 0 : index
    %9 = vector.load %arg4[%c0_6, %c0_7] : memref<128x128xbf16, #tpu.memory_space<vmem>>, vector<128x128xbf16>
    %cst_8 = arith.constant dense<0.000000e+00> : vector<8x128xf32>
    %10 = tpu.matmul %8, %9, %cst_8 {dimension_numbers = #tpu.dot_dimension_numbers<[1], [0], [0], [1], [0, 0, 1, 1], [], []>} : vector<8x128xbf16>, vector<128x128xbf16>, vector<8x128xf32> -> vector<8x128xf32>
    %c0_9 = arith.constant 0 : index
    %c0_10 = arith.constant 0 : index
    %11 = vector.load %arg5[%c0_9, %c0_10] : memref<1x128xf32, #tpu.memory_space<vmem>>, vector<1x128xf32>
    %12 = vector.broadcast %11 : vector<1x128xf32> to vector<8x128xf32>
    %13 = arith.addf %10, %12 : vector<8x128xf32>
    %14 = vector.extract_strided_slice %13 {offsets = [0, 0], sizes = [8, 32], strides = [1, 1]} : vector<8x128xf32> to vector<8x32xf32>
    %15 = vector.extract_strided_slice %13 {offsets = [0, 32], sizes = [8, 32], strides = [1, 1]} : vector<8x128xf32> to vector<8x32xf32>
    %cst_11 = arith.constant 5.000000e-01 : f32
    %16 = vector.broadcast %cst_11 : f32 to vector<8x32xf32>
    %17 = arith.mulf %16, %15 : vector<8x32xf32>
    %18 = math.exp %17 : vector<8x32xf32>
    %c0_12 = arith.constant 0 : index
    %c0_13 = arith.constant 0 : index
    %19 = vector.load %arg6[%c0_12, %c0_13] : memref<8x32xf32, #tpu.memory_space<vmem>>, vector<8x32xf32>
    %20 = arith.mulf %18, %19 : vector<8x32xf32>
    %21 = arith.addf %14, %20 : vector<8x32xf32>
    %22 = arith.truncf %21 : vector<8x32xf32> to vector<8x32xbf16>
    %c0_14 = arith.constant 0 : index
    %c0_15 = arith.constant 0 : index
    %23 = vector.load %arg7[%c0_14, %c0_15] : memref<32x128xbf16, #tpu.memory_space<vmem>>, vector<32x128xbf16>
    %cst_16 = arith.constant dense<0.000000e+00> : vector<8x128xf32>
    %24 = tpu.matmul %22, %23, %cst_16 {dimension_numbers = #tpu.dot_dimension_numbers<[1], [0], [0], [1], [0, 0, 1, 1], [], []>} : vector<8x32xbf16>, vector<32x128xbf16>, vector<8x128xf32> -> vector<8x128xf32>
    %c0_17 = arith.constant 0 : index
    %c0_18 = arith.constant 0 : index
    %25 = vector.load %arg8[%c0_17, %c0_18] : memref<1x128xf32, #tpu.memory_space<vmem>>, vector<1x128xf32>
    %26 = vector.broadcast %25 : vector<1x128xf32> to vector<8x128xf32>
    %27 = arith.addf %24, %26 : vector<8x128xf32>
    %cst_19 = arith.constant 0.000000e+00 : f32
    %28 = vector.broadcast %cst_19 : f32 to vector<8x128xf32>
    %29 = arith.maximumf %27, %28 : vector<8x128xf32>
    %30 = arith.truncf %29 : vector<8x128xf32> to vector<8x128xbf16>
    %c0_20 = arith.constant 0 : index
    %c0_21 = arith.constant 0 : index
    %31 = vector.load %arg9[%c0_20, %c0_21] : memref<128x256xbf16, #tpu.memory_space<vmem>>, vector<128x256xbf16>
    %cst_22 = arith.constant dense<0.000000e+00> : vector<8x256xf32>
    %32 = tpu.matmul %30, %31, %cst_22 {dimension_numbers = #tpu.dot_dimension_numbers<[1], [0], [0], [1], [0, 0, 1, 1], [], []>} : vector<8x128xbf16>, vector<128x256xbf16>, vector<8x256xf32> -> vector<8x256xf32>
    %c0_23 = arith.constant 0 : index
    %c0_24 = arith.constant 0 : index
    %33 = vector.load %arg10[%c0_23, %c0_24] : memref<1x256xf32, #tpu.memory_space<vmem>>, vector<1x256xf32>
    %34 = vector.broadcast %33 : vector<1x256xf32> to vector<8x256xf32>
    %35 = arith.addf %32, %34 : vector<8x256xf32>
    %cst_25 = arith.constant 0.000000e+00 : f32
    %36 = vector.broadcast %cst_25 : f32 to vector<8x256xf32>
    %37 = arith.subf %36, %35 : vector<8x256xf32>
    %38 = math.exp %37 : vector<8x256xf32>
    %cst_26 = arith.constant 1.000000e+00 : f32
    %39 = vector.broadcast %cst_26 : f32 to vector<8x256xf32>
    %40 = arith.addf %39, %38 : vector<8x256xf32>
    %41 = tpu.reciprocal %40 {approx = true} : vector<8x256xf32> -> vector<8x256xf32>
    %c0_27 = arith.constant 0 : index
    %c0_28 = arith.constant 0 : index
    %42 = vector.load %arg11[%c0_27, %c0_28] : memref<8x256xf32, #tpu.memory_space<vmem>>, vector<8x256xf32>
    tpu.vector_store %arg11[%c0_27, %c0_28], %41 {strides = array<i32>} : memref<8x256xf32, #tpu.memory_space<vmem>>, vector<8x256xf32>,
    %c0_29 = arith.constant 0 : index
    %c0_30 = arith.constant 0 : index
    %43 = vector.load %arg12[%c0_29, %c0_30] : memref<8x128xf32, #tpu.memory_space<vmem>>, vector<8x128xf32>
    tpu.vector_store %arg12[%c0_29, %c0_30], %13 {strides = array<i32>} : memref<8x128xf32, #tpu.memory_space<vmem>>, vector<8x128xf32>,
    return
  }
  func.func @transform_0(%arg0: i32) -> (i32, i32) {
    %c0_i32 = arith.constant 0 : i32
    %c0_i32_0 = arith.constant 0 : i32
    return %arg0, %c0_i32 : i32, i32
  }
  func.func @transform_1(%arg0: i32) -> (i32, i32) {
    %c0_i32 = arith.constant 0 : i32
    %c0_i32_0 = arith.constant 0 : i32
    %c0_i32_1 = arith.constant 0 : i32
    return %c0_i32, %c0_i32_0 : i32, i32
  }
  func.func @transform_2(%arg0: i32) -> (i32, i32) {
    %c0_i32 = arith.constant 0 : i32
    %c0_i32_0 = arith.constant 0 : i32
    %c0_i32_1 = arith.constant 0 : i32
    return %c0_i32, %c0_i32_0 : i32, i32
  }
  func.func @transform_3(%arg0: i32) -> (i32, i32) {
    %c0_i32 = arith.constant 0 : i32
    %c0_i32_0 = arith.constant 0 : i32
    %c0_i32_1 = arith.constant 0 : i32
    return %c0_i32, %c0_i32_0 : i32, i32
  }
  func.func @transform_4(%arg0: i32) -> (i32, i32) {
    %c0_i32 = arith.constant 0 : i32
    %c0_i32_0 = arith.constant 0 : i32
    %c0_i32_1 = arith.constant 0 : i32
    return %c0_i32, %c0_i32_0 : i32, i32
  }
  func.func @transform_5(%arg0: i32) -> (i32, i32) {
    %c0_i32 = arith.constant 0 : i32
    %c0_i32_0 = arith.constant 0 : i32
    return %arg0, %c0_i32 : i32, i32
  }
  func.func @transform_6(%arg0: i32) -> (i32, i32) {
    %c0_i32 = arith.constant 0 : i32
    %c0_i32_0 = arith.constant 0 : i32
    %c0_i32_1 = arith.constant 0 : i32
    return %c0_i32, %c0_i32_0 : i32, i32
  }
  func.func @transform_7(%arg0: i32) -> (i32, i32) {
    %c0_i32 = arith.constant 0 : i32
    %c0_i32_0 = arith.constant 0 : i32
    %c0_i32_1 = arith.constant 0 : i32
    return %c0_i32, %c0_i32_0 : i32, i32
  }
  func.func @transform_8(%arg0: i32) -> (i32, i32) {
    %c0_i32 = arith.constant 0 : i32
    %c0_i32_0 = arith.constant 0 : i32
    %c0_i32_1 = arith.constant 0 : i32
    return %c0_i32, %c0_i32_0 : i32, i32
  }
  func.func @transform_9(%arg0: i32) -> (i32, i32) {
    %c0_i32 = arith.constant 0 : i32
    %c0_i32_0 = arith.constant 0 : i32
    %c0_i32_1 = arith.constant 0 : i32
    return %c0_i32, %c0_i32_0 : i32, i32
  }
  func.func @transform_10(%arg0: i32) -> (i32, i32) {
    %c0_i32 = arith.constant 0 : i32
    %c0_i32_0 = arith.constant 0 : i32
    return %arg0, %c0_i32 : i32, i32
  }
  func.func @transform_11(%arg0: i32) -> (i32, i32) {
    %c0_i32 = arith.constant 0 : i32
    %c0_i32_0 = arith.constant 0 : i32
    return %arg0, %c0_i32 : i32, i32
  }
}

</mosaic_0001>

<llo_original>
// kernel: tpu_custom_call.1
$region0: #{tpu_custom_call.1}
  #allocation0 [shape = 'u32[]', space=smem, size = 0x4, offset = 0x4, fixed_abs, tag = 'smem constant byte address 0x4 - core index']
  #allocation1 [shape = 'u32[144,128]{1,0:T(1,128)}', space=vmem, size = 0x12000, scoped, tag = 'internal scratch']
  %s0 = inlined_call_operand.hbm [shape: bf16[8,256], index: 0, kind: input, shape index: {}]
  %s1 = inlined_call_operand.hbm [shape: bf16[256,128], index: 1, kind: input, shape index: {}]
  %s2 = inlined_call_operand.hbm [shape: f32[1,128], index: 2, kind: input, shape index: {}]
  %s3 = inlined_call_operand.hbm [shape: bf16[128,128], index: 3, kind: input, shape index: {}]
  %s4 = inlined_call_operand.hbm [shape: f32[1,128], index: 4, kind: input, shape index: {}]
  %s5 = inlined_call_operand.vmem [shape: f32[8,32], index: 5, kind: input, shape index: {}]
  %s6 = inlined_call_operand.hbm [shape: bf16[32,128], index: 6, kind: input, shape index: {}]
  %s7 = inlined_call_operand.vmem [shape: f32[1,128], index: 7, kind: input, shape index: {}]
  %s8 = inlined_call_operand.hbm [shape: bf16[128,256], index: 8, kind: input, shape index: {}]
  %s9 = inlined_call_operand.vmem [shape: f32[1,256], index: 9, kind: input, shape index: {}]
  %s10 = inlined_call_operand.hbm [shape: f32[8,256], index: 10, kind: output, shape index: {0}]
  %s11 = inlined_call_operand.hbm [shape: f32[8,128], index: 11, kind: output, shape index: {1}]
  %12 = xla_tuple %s10, %s11
  %s13 = sld [smem:[#allocation0]]
  $region86: #{tpu_custom_call.1} parent=0
    _
  %s15 = ssub.s32 1, %s13
  %s16 = scalar_select 0, %s15, %s13
  $region1: #{tpu_custom_call.1} parent=0
    #allocation2 [shape = 'u8[4096]{0}', space=vmem, size = 0x1000, scoped, tag = 'input window, operand 0, single buffered']
    #allocation3 [shape = 's32[1]{0}', space=sflag, size = 0x4, scoped, tag = 'scoped memory for tpu_custom_call.1']
    #allocation4 [shape = 's32[1]{0}', space=sflag, size = 0x4, scoped, tag = 'scoped memory for tpu_custom_call.1']
    #allocation5 [shape = 'u8[65536]{0}', space=vmem, size = 0x10000, scoped, tag = 'input window, operand 1, single buffered']
    #allocation6 [shape = 's32[1]{0}', space=sflag, size = 0x4, scoped, tag = 'scoped memory for tpu_custom_call.1']
    #allocation7 [shape = 'u8[512]{0}', space=vmem, size = 0x400, scoped, tag = 'input window, operand 2, single buffered']
    #allocation8 [shape = 'u8[32768]{0}', space=vmem, size = 0x8000, scoped, tag = 'input window, operand 3, single buffered']
    #allocation9 [shape = 's32[1]{0}', space=sflag, size = 0x4, scoped, tag = 'scoped memory for tpu_custom_call.1']
    #allocation10 [shape = 'u8[512]{0}', space=vmem, size = 0x400, scoped, tag = 'input window, operand 4, single buffered']
    #allocation11 [shape = 'u8[8192]{0}', space=vmem, size = 0x2000, scoped, tag = 'input window, operand 6, single buffered']
    #allocation12 [shape = 's32[1]{0}', space=sflag, size = 0x4, scoped, tag = 'scoped memory for tpu_custom_call.1']
    #allocation13 [shape = 'u8[65536]{0}', space=vmem, size = 0x10000, scoped, tag = 'input window, operand 8, single buffered']
    #allocation14 [shape = 'u8[8192]{0}', space=vmem, size = 0x2000, scoped, tag = 'output window, operand 0, single buffered']
    #allocation15 [shape = 'u8[4096]{0}', space=vmem, size = 0x1000, scoped, tag = 'output window, operand 1, single buffered']
    #allocation16 [shape = 's32[1]{0}', space=sflag, size = 0x4, scoped, tag = 'scoped memory for tpu_custom_call.1']
    %17 = vsyncpa [#allocation3], 0
    %18 = vsyncpa [#allocation6], 0
    %19 = vsyncpa [#allocation9], 0
    %20 = vsyncpa [#allocation12], 0
    %21 = vsyncpa [#allocation4], 0
    %22 = vsyncpa [#allocation16], 0
    // Predicated region
    $region2: #{tpu_custom_call.1} parent=1 // pred_check
      _
    $region3: #{tpu_custom_call.1} parent=1 // pred_check_branch
      %24 = sbr.rel (0) target = $region5
    $region4: #{tpu_custom_call.1} parent=1 // pred_region
      %s26 = ssub.s32 128, 128
      %27 = vsyncadd [#allocation3], %s26
      %s29 = sshll.u32 [#allocation2], 4
      %s30 = int_to_ptr.vmem [resolvable:$true] %s29
      %32 = dma.hbm_to_vmem [thread:$0]  %s0, 128, %s30, [#allocation3]
    $region5: #{tpu_custom_call.1} parent=1 // pred_fallthru
      _
    // Predicated region
    $region6: #{tpu_custom_call.1} parent=1 // pred_check
      _
    $region7: #{tpu_custom_call.1} parent=1 // pred_check_branch
      %34 = sbr.rel (0) target = $region9
    $region8: #{tpu_custom_call.1} parent=1 // pred_region
      %s36 = ssub.s32 2048, 2048
      %37 = vsyncadd [#allocation6], %s36
      %s38 = sshll.u32 [#allocation5], 4
      %s39 = int_to_ptr.vmem [resolvable:$true] %s38
      %44 = dma.hbm_to_vmem [thread:$0]  %s1, 2048, %s39, [#allocation6], 64, 64, 4
    $region9: #{tpu_custom_call.1} parent=1 // pred_fallthru
      _
    // Predicated region
    $region10: #{tpu_custom_call.1} parent=1 // pred_check
      _
    $region11: #{tpu_custom_call.1} parent=1 // pred_check_branch
      %46 = sbr.rel (0) target = $region13
    $region12: #{tpu_custom_call.1} parent=1 // pred_region
      %s48 = ssub.s32 16, 16
      %49 = vsyncadd [#allocation6], %s48
      %s51 = sshll.u32 [#allocation7], 4
      %s52 = int_to_ptr.vmem [resolvable:$true] %s51
      %54 = dma.hbm_to_vmem [thread:$0]  %s2, 16, %s52, [#allocation6]
    $region13: #{tpu_custom_call.1} parent=1 // pred_fallthru
      _
    // Predicated region
    $region14: #{tpu_custom_call.1} parent=1 // pred_check
      _
    $region15: #{tpu_custom_call.1} parent=1 // pred_check_branch
      %56 = sbr.rel (0) target = $region17
    $region16: #{tpu_custom_call.1} parent=1 // pred_region
      %s58 = ssub.s32 1024, 1024
      %59 = vsyncadd [#allocation9], %s58
      %s60 = sshll.u32 [#allocation8], 4
      %s61 = int_to_ptr.vmem [resolvable:$true] %s60
      %66 = dma.hbm_to_vmem [thread:$0]  %s3, 1024, %s61, [#allocation9], 64, 64, 4
    $region17: #{tpu_custom_call.1} parent=1 // pred_fallthru
      _
    // Predicated region
    $region18: #{tpu_custom_call.1} parent=1 // pred_check
      _
    $region19: #{tpu_custom_call.1} parent=1 // pred_check_branch
      %68 = sbr.rel (0) target = $region21
    $region20: #{tpu_custom_call.1} parent=1 // pred_region
      %s70 = ssub.s32 16, 16
      %71 = vsyncadd [#allocation9], %s70
      %s73 = sshll.u32 [#allocation10], 4
      %s74 = int_to_ptr.vmem [resolvable:$true] %s73
      %76 = dma.hbm_to_vmem [thread:$0]  %s4, 16, %s74, [#allocation9]
    $region21: #{tpu_custom_call.1} parent=1 // pred_fallthru
      _
    // Predicated region
    $region22: #{tpu_custom_call.1} parent=1 // pred_check
      _
    $region23: #{tpu_custom_call.1} parent=1 // pred_check_branch
      %78 = sbr.rel (0) target = $region25
    $region24: #{tpu_custom_call.1} parent=1 // pred_region
      _
    $region25: #{tpu_custom_call.1} parent=1 // pred_fallthru
      _
    // Predicated region
    $region26: #{tpu_custom_call.1} parent=1 // pred_check
      _
    $region27: #{tpu_custom_call.1} parent=1 // pred_check_branch
      %80 = sbr.rel (0) target = $region29
    $region28: #{tpu_custom_call.1} parent=1 // pred_region
      %s82 = ssub.s32 256, 256
      %83 = vsyncadd [#allocation12], %s82
      %s84 = sshll.u32 [#allocation11], 4
      %s85 = int_to_ptr.vmem [resolvable:$true] %s84
      %90 = dma.hbm_to_vmem [thread:$0]  %s6, 256, %s85, [#allocation12], 64, 64, 4
    $region29: #{tpu_custom_call.1} parent=1 // pred_fallthru
      _
    // Predicated region
    $region30: #{tpu_custom_call.1} parent=1 // pred_check
      _
    $region31: #{tpu_custom_call.1} parent=1 // pred_check_branch
      %92 = sbr.rel (0) target = $region33
    $region32: #{tpu_custom_call.1} parent=1 // pred_region
      _
    $region33: #{tpu_custom_call.1} parent=1 // pred_fallthru
      _
    // Predicated region
    $region34: #{tpu_custom_call.1} parent=1 // pred_check
      _
    $region35: #{tpu_custom_call.1} parent=1 // pred_check_branch
      %94 = sbr.rel (0) target = $region37
    $region36: #{tpu_custom_call.1} parent=1 // pred_region
      %s96 = ssub.s32 2048, 2048
      %97 = vsyncadd [#allocation12], %s96
      %s98 = sshll.u32 [#allocation13], 4
      %s99 = int_to_ptr.vmem [resolvable:$true] %s98
      %104 = dma.hbm_to_vmem [thread:$0]  %s8, 2048, %s99, [#allocation12], 128, 128, 8
    $region37: #{tpu_custom_call.1} parent=1 // pred_fallthru
      _
    // Predicated region
    $region38: #{tpu_custom_call.1} parent=1 // pred_check
      _
    $region39: #{tpu_custom_call.1} parent=1 // pred_check_branch
      %106 = sbr.rel (0) target = $region41
    $region40: #{tpu_custom_call.1} parent=1 // pred_region
      _
    $region41: #{tpu_custom_call.1} parent=1 // pred_fallthru
      _
    // Predicated region
    $region42: #{tpu_custom_call.1} parent=1 // pred_check
      _
    $region43: #{tpu_custom_call.1} parent=1 // pred_check_branch
      %108 = sbr.rel (0) target = $region45
    $region44: #{tpu_custom_call.1} parent=1 // pred_region
      %109 = dma.done [#allocation3], 128
    $region45: #{tpu_custom_call.1} parent=1 // pred_fallthru
      _
    // Predicated region
    $region46: #{tpu_custom_call.1} parent=1 // pred_check
      _
    $region47: #{tpu_custom_call.1} parent=1 // pred_check_branch
      %111 = sbr.rel (0) target = $region49
    $region48: #{tpu_custom_call.1} parent=1 // pred_region
      %112 = dma.done [#allocation6], 2048
    $region49: #{tpu_custom_call.1} parent=1 // pred_fallthru
      _
    // Predicated region
    $region50: #{tpu_custom_call.1} parent=1 // pred_check
      _
    $region51: #{tpu_custom_call.1} parent=1 // pred_check_branch
      %114 = sbr.rel (0) target = $region53
    $region52: #{tpu_custom_call.1} parent=1 // pred_region
      %115 = dma.done [#allocation6], 16
    $region53: #{tpu_custom_call.1} parent=1 // pred_fallthru
      _
    // Predicated region
    $region54: #{tpu_custom_call.1} parent=1 // pred_check
      _
    $region55: #{tpu_custom_call.1} parent=1 // pred_check_branch
      %117 = sbr.rel (0) target = $region57
    $region56: #{tpu_custom_call.1} parent=1 // pred_region
      %118 = dma.done [#allocation9], 1024
    $region57: #{tpu_custom_call.1} parent=1 // pred_fallthru
      _
    // Predicated region
    $region58: #{tpu_custom_call.1} parent=1 // pred_check
      _
    $region59: #{tpu_custom_call.1} parent=1 // pred_check_branch
      %120 = sbr.rel (0) target = $region61
    $region60: #{tpu_custom_call.1} parent=1 // pred_region
      %121 = dma.done [#allocation9], 16
    $region61: #{tpu_custom_call.1} parent=1 // pred_fallthru
      _
    // Predicated region
    $region62: #{tpu_custom_call.1} parent=1 // pred_check
      _
    $region63: #{tpu_custom_call.1} parent=1 // pred_check_branch
      %123 = sbr.rel (0) target = $region65
    $region64: #{tpu_custom_call.1} parent=1 // pred_region
      %124 = dma.done [#allocation12], 256
    $region65: #{tpu_custom_call.1} parent=1 // pred_fallthru
      _
    // Predicated region
    $region66: #{tpu_custom_call.1} parent=1 // pred_check
      _
    $region67: #{tpu_custom_call.1} parent=1 // pred_check_branch
      %126 = sbr.rel (0) target = $region69
    $region68: #{tpu_custom_call.1} parent=1 // pred_region
      %127 = dma.done [#allocation12], 2048
    $region69: #{tpu_custom_call.1} parent=1 // pred_fallthru
      _
    %v129 = vld [vmem:[#allocation2] sm:$0xff]
    %v130 = vld [vmem:[#allocation5] sm:$0xf]
    %v131 = vld [vmem:[#allocation5 + $0x4] sm:$0xf]
    %v132 = vld [vmem:[#allocation5 + $0x8] sm:$0xf]
    %v133 = vld [vmem:[#allocation5 + $0xc] sm:$0xf]
    %v134 = vld [vmem:[#allocation5 + $0x10] sm:$0xf]
    %v135 = vld [vmem:[#allocation5 + $0x14] sm:$0xf]
    %v136 = vld [vmem:[#allocation5 + $0x18] sm:$0xf]
    %v137 = vld [vmem:[#allocation5 + $0x1c] sm:$0xf]
    %v138 = vld [vmem:[#allocation5 + $0x20] sm:$0xf]
    %v139 = vld [vmem:[#allocation5 + $0x24] sm:$0xf]
    %v140 = vld [vmem:[#allocation5 + $0x28] sm:$0xf]
    %v141 = vld [vmem:[#allocation5 + $0x2c] sm:$0xf]
    %v142 = vld [vmem:[#allocation5 + $0x30] sm:$0xf]
    %v143 = vld [vmem:[#allocation5 + $0x34] sm:$0xf]
    %v144 = vld [vmem:[#allocation5 + $0x38] sm:$0xf]
    %v145 = vld [vmem:[#allocation5 + $0x3c] sm:$0xf]
    %v146 = vld [vmem:[#allocation5 + $0x40] sm:$0xf]
    %v147 = vld [vmem:[#allocation5 + $0x44] sm:$0xf]
    %v148 = vld [vmem:[#allocation5 + $0x48] sm:$0xf]
    %v149 = vld [vmem:[#allocation5 + $0x4c] sm:$0xf]
    %v150 = vld [vmem:[#allocation5 + $0x50] sm:$0xf]
    %v151 = vld [vmem:[#allocation5 + $0x54] sm:$0xf]
    %v152 = vld [vmem:[#allocation5 + $0x58] sm:$0xf]
    %v153 = vld [vmem:[#allocation5 + $0x5c] sm:$0xf]
    %v154 = vld [vmem:[#allocation5 + $0x60] sm:$0xf]
    %v155 = vld [vmem:[#allocation5 + $0x64] sm:$0xf]
    %v156 = vld [vmem:[#allocation5 + $0x68] sm:$0xf]
    %v157 = vld [vmem:[#allocation5 + $0x6c] sm:$0xf]
    %v158 = vld [vmem:[#allocation5 + $0x70] sm:$0xf]
    %v159 = vld [vmem:[#allocation5 + $0x74] sm:$0xf]
    %v160 = vld [vmem:[#allocation5 + $0x78] sm:$0xf]
    %v161 = vld [vmem:[#allocation5 + $0x7c] sm:$0xf]
    %v162 = vld [vmem:[#allocation7] sm:$0x1]
    %v164 = vlaneseq
    %v165 = vshrl.u32 %v164, 7
    %v166 = vsub.s32 0, %v165
    %v167 = vrot.slane %v162, %v166
    %v170 = vunpack.c.l.b16 %v129
    %v171 = vunpack.c.h.b16 %v129
    %v172 = vpack.c.b16 %v170, %v170
    %v173 = vpack.c.b16 %v171, %v171
    %v208 = vunpack.c.l.b16 %v130
    %v209 = vunpack.c.l.b16 %v131
    %v210 = vunpack.c.l.b16 %v132
    %v211 = vunpack.c.l.b16 %v133
    %v212 = vunpack.c.l.b16 %v134
    %v213 = vunpack.c.l.b16 %v135
    %v214 = vunpack.c.l.b16 %v136
    %v215 = vunpack.c.l.b16 %v137
    %v216 = vunpack.c.l.b16 %v138
    %v217 = vunpack.c.l.b16 %v139
    %v218 = vunpack.c.l.b16 %v140
    %v219 = vunpack.c.l.b16 %v141
    %v220 = vunpack.c.l.b16 %v142
    %v221 = vunpack.c.l.b16 %v143
    %v222 = vunpack.c.l.b16 %v144
    %v223 = vunpack.c.l.b16 %v145
    %v224 = vunpack.c.l.b16 %v146
    %v225 = vunpack.c.l.b16 %v147
    %v226 = vunpack.c.l.b16 %v148
    %v227 = vunpack.c.l.b16 %v149
    %v228 = vunpack.c.l.b16 %v150
    %v229 = vunpack.c.l.b16 %v151
    %v230 = vunpack.c.l.b16 %v152
    %v231 = vunpack.c.l.b16 %v153
    %v232 = vunpack.c.l.b16 %v154
    %v233 = vunpack.c.l.b16 %v155
    %v234 = vunpack.c.l.b16 %v156
    %v235 = vunpack.c.l.b16 %v157
    %v236 = vunpack.c.l.b16 %v158
    %v237 = vunpack.c.l.b16 %v159
    %v238 = vunpack.c.l.b16 %v160
    %v239 = vunpack.c.l.b16 %v161
    %v240 = vpack.c.b16 %v209, %v208
    %v241 = vpack.c.b16 %v211, %v210
    %v242 = vpack.c.b16 %v213, %v212
    %v243 = vpack.c.b16 %v215, %v214
    %v244 = vpack.c.b16 %v217, %v216
    %v245 = vpack.c.b16 %v219, %v218
    %v246 = vpack.c.b16 %v221, %v220
    %v247 = vpack.c.b16 %v223, %v222
    %v248 = vpack.c.b16 %v225, %v224
    %v249 = vpack.c.b16 %v227, %v226
    %v250 = vpack.c.b16 %v229, %v228
    %v251 = vpack.c.b16 %v231, %v230
    %v252 = vpack.c.b16 %v233, %v232
    %v253 = vpack.c.b16 %v235, %v234
    %v254 = vpack.c.b16 %v237, %v236
    %v255 = vpack.c.b16 %v239, %v238
    %272 = vmatprep.subr.bf16.mxu0 0
    %273 = vmatpush1.bf16.msra.mxu0 %v247
    %274 = vmatprep.subr.bf16.mxu0 0
    %275 = vmatpush1.bf16.msra.mxu0 %v246
    %276 = vmatprep.subr.bf16.mxu0 0
    %277 = vmatpush1.bf16.msra.mxu0 %v245
    %278 = vmatprep.subr.bf16.mxu0 0
    %279 = vmatpush1.bf16.msra.mxu0 %v244
    %280 = vmatprep.subr.bf16.mxu0 0
    %281 = vmatpush1.bf16.msra.mxu0 %v243
    %282 = vmatprep.subr.bf16.mxu0 0
    %283 = vmatpush1.bf16.msra.mxu0 %v242
    %284 = vmatprep.subr.bf16.mxu0 0
    %285 = vmatpush1.bf16.msra.mxu0 %v241
    %286 = vmatprep.subr.bf16.mxu0 0
    %287 = vmatpush1.bf16.msra.mxu0 %v240
    %288 = vmatprep.subr.bf16.mxu0 0
    %289 = vmatpush2.bf16.msra.mxu0 %v255
    %290 = vmatprep.subr.bf16.mxu0 0
    %291 = vmatpush2.bf16.msra.mxu0 %v254
    %292 = vmatprep.subr.bf16.mxu0 0
    %293 = vmatpush2.bf16.msra.mxu0 %v253
    %294 = vmatprep.subr.bf16.mxu0 0
    %295 = vmatpush2.bf16.msra.mxu0 %v252
    %296 = vmatprep.subr.bf16.mxu0 0
    %297 = vmatpush2.bf16.msra.mxu0 %v251
    %298 = vmatprep.subr.bf16.mxu0 0
    %299 = vmatpush2.bf16.msra.mxu0 %v250
    %300 = vmatprep.subr.bf16.mxu0 0
    %301 = vmatpush2.bf16.msra.mxu0 %v249
    %302 = vmatprep.subr.bf16.mxu0 0
    %303 = vmatpush2.bf16.msra.mxu0 %v248
    %304 = vmatprep.mubr.bf16.mxu0 %v173
    %305 = vmatmul.mubr.bf16.gmra.mxu0 %v172
    %v306 = vpop.f32.mrf.mxu0
    %v307 = vadd.f32 %v167, %v306
    %v308 = vpop.f32.mrf.mxu0
    %v309 = vpop.f32.mrf.mxu0
    %v310 = vpop.f32.mrf.mxu0
    %311 = vdwg.mxu0
    %v312 = vmax.f32 %v307, 0.0
    %v313 = vpack.c.bf16 %v312, %v312
    %v314 = vld [vmem:[#allocation8] sm:$0xf]
    %v315 = vld [vmem:[#allocation8 + $0x4] sm:$0xf]
    %v316 = vld [vmem:[#allocation8 + $0x8] sm:$0xf]
    %v317 = vld [vmem:[#allocation8 + $0xc] sm:$0xf]
    %v318 = vld [vmem:[#allocation8 + $0x10] sm:$0xf]
    %v319 = vld [vmem:[#allocation8 + $0x14] sm:$0xf]
    %v320 = vld [vmem:[#allocation8 + $0x18] sm:$0xf]
    %v321 = vld [vmem:[#allocation8 + $0x1c] sm:$0xf]
    %v322 = vld [vmem:[#allocation8 + $0x20] sm:$0xf]
    %v323 = vld [vmem:[#allocation8 + $0x24] sm:$0xf]
    %v324 = vld [vmem:[#allocation8 + $0x28] sm:$0xf]
    %v325 = vld [vmem:[#allocation8 + $0x2c] sm:$0xf]
    %v326 = vld [vmem:[#allocation8 + $0x30] sm:$0xf]
    %v327 = vld [vmem:[#allocation8 + $0x34] sm:$0xf]
    %v328 = vld [vmem:[#allocation8 + $0x38] sm:$0xf]
    %v329 = vld [vmem:[#allocation8 + $0x3c] sm:$0xf]
    %v330 = vld [vmem:[#allocation10] sm:$0x1]
    %v332 = vlaneseq
    %v333 = vshrl.u32 %v332, 7
    %v334 = vsub.s32 0, %v333
    %v335 = vrot.slane %v330, %v334
    %v353 = vunpack.c.l.b16 %v314
    %v354 = vunpack.c.l.b16 %v315
    %v355 = vunpack.c.l.b16 %v316
    %v356 = vunpack.c.l.b16 %v317
    %v357 = vunpack.c.l.b16 %v318
    %v358 = vunpack.c.l.b16 %v319
    %v359 = vunpack.c.l.b16 %v320
    %v360 = vunpack.c.l.b16 %v321
    %v361 = vunpack.c.l.b16 %v322
    %v362 = vunpack.c.l.b16 %v323
    %v363 = vunpack.c.l.b16 %v324
    %v364 = vunpack.c.l.b16 %v325
    %v365 = vunpack.c.l.b16 %v326
    %v366 = vunpack.c.l.b16 %v327
    %v367 = vunpack.c.l.b16 %v328
    %v368 = vunpack.c.l.b16 %v329
    %v369 = vpack.c.b16 %v354, %v353
    %v370 = vpack.c.b16 %v356, %v355
    %v371 = vpack.c.b16 %v358, %v357
    %v372 = vpack.c.b16 %v360, %v359
    %v373 = vpack.c.b16 %v362, %v361
    %v374 = vpack.c.b16 %v364, %v363
    %v375 = vpack.c.b16 %v366, %v365
    %v376 = vpack.c.b16 %v368, %v367
    %385 = vmatprep.subr.bf16.mxu0 0
    %386 = vmatpush1.bf16.msra.mxu0 %v376
    %387 = vmatprep.subr.bf16.mxu0 0
    %388 = vmatpush1.bf16.msra.mxu0 %v375
    %389 = vmatprep.subr.bf16.mxu0 0
    %390 = vmatpush1.bf16.msra.mxu0 %v374
    %391 = vmatprep.subr.bf16.mxu0 0
    %392 = vmatpush1.bf16.msra.mxu0 %v373
    %393 = vmatprep.subr.bf16.mxu0 0
    %394 = vmatpush1.bf16.msra.mxu0 %v372
    %395 = vmatprep.subr.bf16.mxu0 0
    %396 = vmatpush1.bf16.msra.mxu0 %v371
    %397 = vmatprep.subr.bf16.mxu0 0
    %398 = vmatpush1.bf16.msra.mxu0 %v370
    %399 = vmatprep.subr.bf16.mxu0 0
    %400 = vmatpush1.bf16.msra.mxu0 %v369
    %401 = vmatprep.subr.bf16.mxu0 0
    %402 = vmatpush2.bf16.msra.mxu0 0
    %403 = vmatprep.subr.bf16.mxu0 0
    %404 = vmatpush2.bf16.msra.mxu0 0
    %405 = vmatprep.subr.bf16.mxu0 0
    %406 = vmatpush2.bf16.msra.mxu0 0
    %407 = vmatprep.subr.bf16.mxu0 0
    %408 = vmatpush2.bf16.msra.mxu0 0
    %409 = vmatprep.subr.bf16.mxu0 0
    %410 = vmatpush2.bf16.msra.mxu0 0
    %411 = vmatprep.subr.bf16.mxu0 0
    %412 = vmatpush2.bf16.msra.mxu0 0
    %413 = vmatprep.subr.bf16.mxu0 0
    %414 = vmatpush2.bf16.msra.mxu0 0
    %415 = vmatprep.subr.bf16.mxu0 0
    %416 = vmatpush2.bf16.msra.mxu0 0
    %417 = vmatprep.mubr.bf16.mxu0 0
    %418 = vmatmul.mubr.bf16.gmra.mxu0 %v313
    %v419 = vpop.f32.mrf.mxu0
    %v420 = vadd.f32 %v335, %v419
    %v421 = vpop.f32.mrf.mxu0
    %v422 = vpop.f32.mrf.mxu0
    %v423 = vpop.f32.mrf.mxu0
    %424 = vdwg.mxu0
    %v425 = vmul.f32 %v420, 0.5
    %v426 = vmul.f32 %v425, 1.442695
    %v427 = vpow.pop %v426
    %v428 = vld [vmem:[%s5] sm:$0xff]
    %430 = vrot.lane.b32.xlu0 %v428, 32
    %v431 = vpop.permute.xlu0 %430
    %v433 = vmul.f32 %v427, %v431
    %435 = vrot.lane.b32.xlu0 %v433, 96
    %v436 = vpop.permute.xlu0 %435
    %v438 = vadd.f32 %v420, %v436
    %v439 = vpack.c.bf16 %v438, %v438
    %v440 = vld [vmem:[#allocation11] sm:$0xf]
    %v441 = vld [vmem:[#allocation11 + $0x4] sm:$0xf]
    %v442 = vld [vmem:[#allocation11 + $0x8] sm:$0xf]
    %v443 = vld [vmem:[#allocation11 + $0xc] sm:$0xf]
    %v444 = vld [vmem:[%s7] sm:$0x1]
    %v446 = vlaneseq
    %v447 = vshrl.u32 %v446, 7
    %v448 = vsub.s32 0, %v447
    %v449 = vrot.slane %v444, %v448
    %v455 = vunpack.c.l.b16 %v440
    %v456 = vunpack.c.l.b16 %v441
    %v457 = vunpack.c.l.b16 %v442
    %v458 = vunpack.c.l.b16 %v443
    %v459 = vpack.c.b16 %v456, %v455
    %v460 = vpack.c.b16 %v458, %v457
    %vm463 = vcmask 261120
    %v465 = vsel %vm463, %v439, 0
    %467 = vmatprep.subr.bf16.mxu0 0
    %468 = vmatpush1.bf16.msra.mxu0 0
    %469 = vmatprep.subr.bf16.mxu0 0
    %470 = vmatpush1.bf16.msra.mxu0 0
    %471 = vmatprep.subr.bf16.mxu0 0
    %472 = vmatpush1.bf16.msra.mxu0 0
    %473 = vmatprep.subr.bf16.mxu0 0
    %474 = vmatpush1.bf16.msra.mxu0 0
    %475 = vmatprep.subr.bf16.mxu0 0
    %476 = vmatpush1.bf16.msra.mxu0 0
    %477 = vmatprep.subr.bf16.mxu0 0
    %478 = vmatpush1.bf16.msra.mxu0 0
    %479 = vmatprep.subr.bf16.mxu0 0
    %480 = vmatpush1.bf16.msra.mxu0 %v460
    %481 = vmatprep.subr.bf16.mxu0 0
    %482 = vmatpush1.bf16.msra.mxu0 %v459
    %483 = vmatprep.subr.bf16.mxu0 0
    %484 = vmatpush2.bf16.msra.mxu0 0
    %485 = vmatprep.subr.bf16.mxu0 0
    %486 = vmatpush2.bf16.msra.mxu0 0
    %487 = vmatprep.subr.bf16.mxu0 0
    %488 = vmatpush2.bf16.msra.mxu0 0
    %489 = vmatprep.subr.bf16.mxu0 0
    %490 = vmatpush2.bf16.msra.mxu0 0
    %491 = vmatprep.subr.bf16.mxu0 0
    %492 = vmatpush2.bf16.msra.mxu0 0
    %493 = vmatprep.subr.bf16.mxu0 0
    %494 = vmatpush2.bf16.msra.mxu0 0
    %495 = vmatprep.subr.bf16.mxu0 0
    %496 = vmatpush2.bf16.msra.mxu0 0
    %497 = vmatprep.subr.bf16.mxu0 0
    %498 = vmatpush2.bf16.msra.mxu0 0
    %499 = vmatprep.mubr.bf16.mxu0 0
    %500 = vmatmul.mubr.bf16.gmra.mxu0 %v465
    %v501 = vpop.f32.mrf.mxu0
    %v502 = vadd.f32 %v449, %v501
    %v503 = vpop.f32.mrf.mxu0
    %v504 = vpop.f32.mrf.mxu0
    %v505 = vpop.f32.mrf.mxu0
    %506 = vdwg.mxu0
    %v507 = vmax.f32 %v502, 0.0
    %v508 = vpack.c.bf16 %v507, %v507
    %v509 = vld [vmem:[#allocation13] sm:$0xff]
    %v510 = vld [vmem:[#allocation13 + $0x8] sm:$0xff]
    %v511 = vld [vmem:[#allocation13 + $0x10] sm:$0xff]
    %v512 = vld [vmem:[#allocation13 + $0x18] sm:$0xff]
    %v513 = vld [vmem:[#allocation13 + $0x20] sm:$0xff]
    %v514 = vld [vmem:[#allocation13 + $0x28] sm:$0xff]
    %v515 = vld [vmem:[#allocation13 + $0x30] sm:$0xff]
    %v516 = vld [vmem:[#allocation13 + $0x38] sm:$0xff]
    %v517 = vld [vmem:[#allocation13 + $0x40] sm:$0xff]
    %v518 = vld [vmem:[#allocation13 + $0x48] sm:$0xff]
    %v519 = vld [vmem:[#allocation13 + $0x50] sm:$0xff]
    %v520 = vld [vmem:[#allocation13 + $0x58] sm:$0xff]
    %v521 = vld [vmem:[#allocation13 + $0x60] sm:$0xff]
    %v522 = vld [vmem:[#allocation13 + $0x68] sm:$0xff]
    %v523 = vld [vmem:[#allocation13 + $0x70] sm:$0xff]
    %v524 = vld [vmem:[#allocation13 + $0x78] sm:$0xff]
    %v525 = vld [vmem:[%s9] sm:$0x3]
    %v527 = vlaneseq
    %v528 = vshrl.u32 %v527, 7
    %v529 = vsub.s32 0, %v528
    %v530 = vrot.slane %v525, %v529
    %v531 = vlaneseq
    %v532 = vshrl.u32 %v531, 7
    %v533 = vsub.s32 1, %v532
    %v534 = vrot.slane %v525, %v533
    %v553 = vunpack.c.l.b16 %v509
    %v554 = vunpack.c.h.b16 %v509
    %v555 = vunpack.c.l.b16 %v510
    %v556 = vunpack.c.h.b16 %v510
    %v557 = vunpack.c.l.b16 %v511
    %v558 = vunpack.c.h.b16 %v511
    %v559 = vunpack.c.l.b16 %v512
    %v560 = vunpack.c.h.b16 %v512
    %v561 = vunpack.c.l.b16 %v513
    %v562 = vunpack.c.h.b16 %v513
    %v563 = vunpack.c.l.b16 %v514
    %v564 = vunpack.c.h.b16 %v514
    %v565 = vunpack.c.l.b16 %v515
    %v566 = vunpack.c.h.b16 %v515
    %v567 = vunpack.c.l.b16 %v516
    %v568 = vunpack.c.h.b16 %v516
    %v569 = vunpack.c.l.b16 %v517
    %v570 = vunpack.c.h.b16 %v517
    %v571 = vunpack.c.l.b16 %v518
    %v572 = vunpack.c.h.b16 %v518
    %v573 = vunpack.c.l.b16 %v519
    %v574 = vunpack.c.h.b16 %v519
    %v575 = vunpack.c.l.b16 %v520
    %v576 = vunpack.c.h.b16 %v520
    %v577 = vunpack.c.l.b16 %v521
    %v578 = vunpack.c.h.b16 %v521
    %v579 = vunpack.c.l.b16 %v522
    %v580 = vunpack.c.h.b16 %v522
    %v581 = vunpack.c.l.b16 %v523
    %v582 = vunpack.c.h.b16 %v523
    %v583 = vunpack.c.l.b16 %v524
    %v584 = vunpack.c.h.b16 %v524
    %v585 = vpack.c.b16 %v555, %v553
    %v586 = vpack.c.b16 %v556, %v554
    %v587 = vpack.c.b16 %v559, %v557
    %v588 = vpack.c.b16 %v560, %v558
    %v589 = vpack.c.b16 %v563, %v561
    %v590 = vpack.c.b16 %v564, %v562
    %v591 = vpack.c.b16 %v567, %v565
    %v592 = vpack.c.b16 %v568, %v566
    %v593 = vpack.c.b16 %v571, %v569
    %v594 = vpack.c.b16 %v572, %v570
    %v595 = vpack.c.b16 %v575, %v573
    %v596 = vpack.c.b16 %v576, %v574
    %v597 = vpack.c.b16 %v579, %v577
    %v598 = vpack.c.b16 %v580, %v578
    %v599 = vpack.c.b16 %v583, %v581
    %v600 = vpack.c.b16 %v584, %v582
    %617 = vmatprep.subr.bf16.mxu0 %v600
    %618 = vmatpush1.bf16.msra.mxu0 %v599
    %619 = vmatprep.subr.bf16.mxu0 %v598
    %620 = vmatpush1.bf16.msra.mxu0 %v597
    %621 = vmatprep.subr.bf16.mxu0 %v596
    %622 = vmatpush1.bf16.msra.mxu0 %v595
    %623 = vmatprep.subr.bf16.mxu0 %v594
    %624 = vmatpush1.bf16.msra.mxu0 %v593
    %625 = vmatprep.subr.bf16.mxu0 %v592
    %626 = vmatpush1.bf16.msra.mxu0 %v591
    %627 = vmatprep.subr.bf16.mxu0 %v590
    %628 = vmatpush1.bf16.msra.mxu0 %v589
    %629 = vmatprep.subr.bf16.mxu0 %v588
    %630 = vmatpush1.bf16.msra.mxu0 %v587
    %631 = vmatprep.subr.bf16.mxu0 %v586
    %632 = vmatpush1.bf16.msra.mxu0 %v585
    %633 = vmatprep.subr.bf16.mxu0 0
    %634 = vmatpush2.bf16.msra.mxu0 0
    %635 = vmatprep.subr.bf16.mxu0 0
    %636 = vmatpush2.bf16.msra.mxu0 0
    %637 = vmatprep.subr.bf16.mxu0 0
    %638 = vmatpush2.bf16.msra.mxu0 0
    %639 = vmatprep.subr.bf16.mxu0 0
    %640 = vmatpush2.bf16.msra.mxu0 0
    %641 = vmatprep.subr.bf16.mxu0 0
    %642 = vmatpush2.bf16.msra.mxu0 0
    %643 = vmatprep.subr.bf16.mxu0 0
    %644 = vmatpush2.bf16.msra.mxu0 0
    %645 = vmatprep.subr.bf16.mxu0 0
    %646 = vmatpush2.bf16.msra.mxu0 0
    %647 = vmatprep.subr.bf16.mxu0 0
    %648 = vmatpush2.bf16.msra.mxu0 0
    %649 = vmatprep.mubr.bf16.mxu0 0
    %650 = vmatmul.mubr.bf16.gmra.mxu0 %v508
    %v651 = vpop.f32.mrf.mxu0
    %v652 = vadd.f32 %v530, %v651
    %v653 = vpop.f32.mrf.mxu0
    %v654 = vadd.f32 %v534, %v653
    %v655 = vpop.f32.mrf.mxu0
    %v656 = vpop.f32.mrf.mxu0
    %657 = vdwg.mxu0
    %v658 = vsub.f32 0.0, %v652
    %v659 = vsub.f32 0.0, %v654
    %v660 = vmul.f32 %v658, 1.442695
    %v661 = vpow.pop %v660
    %v662 = vmul.f32 %v659, 1.442695
    %v663 = vpow.pop %v662
    %v664 = vadd.f32 %v661, 1.0
    %v665 = vadd.f32 %v663, 1.0
    %v666 = vrcp.pop %v664
    %v667 = vrcp.pop %v665
    %668 = vst [vmem:[#allocation14] sm:$0xff] %v666
    %669 = vst [vmem:[#allocation14 + $0x8] sm:$0xff] %v667
    %670 = vst [vmem:[#allocation15] sm:$0xff] %v420
    // Predicated region
    $region70: #{tpu_custom_call.1} parent=1 // pred_check
      _
    $region71: #{tpu_custom_call.1} parent=1 // pred_check_branch
      %672 = sbr.rel (0) target = $region73
    $region72: #{tpu_custom_call.1} parent=1 // pred_region
      %s674 = ssub.s32 256, 256
      %675 = vsyncadd [#allocation4], %s674
      %s677 = sshll.u32 [#allocation14], 4
      %s678 = int_to_ptr.vmem [resolvable:$true] %s677
      %680 = dma.vmem_to_hbm [thread:$0]  %s678, 256, %s10, [#allocation4]
    $region73: #{tpu_custom_call.1} parent=1 // pred_fallthru
      _
    // Predicated region
    $region74: #{tpu_custom_call.1} parent=1 // pred_check
      _
    $region75: #{tpu_custom_call.1} parent=1 // pred_check_branch
      %682 = sbr.rel (0) target = $region77
    $region76: #{tpu_custom_call.1} parent=1 // pred_region
      %s684 = ssub.s32 128, 128
      %685 = vsyncadd [#allocation16], %s684
      %s687 = sshll.u32 [#allocation15], 4
      %s688 = int_to_ptr.vmem [resolvable:$true] %s687
      %690 = dma.vmem_to_hbm [thread:$0]  %s688, 128, %s11, [#allocation16]
    $region77: #{tpu_custom_call.1} parent=1 // pred_fallthru
      _
    // Predicated region
    $region78: #{tpu_custom_call.1} parent=1 // pred_check
      _
    $region79: #{tpu_custom_call.1} parent=1 // pred_check_branch
      %692 = sbr.rel (0) target = $region81
    $region80: #{tpu_custom_call.1} parent=1 // pred_region
      %693 = dma.done [#allocation4], 256
    $region81: #{tpu_custom_call.1} parent=1 // pred_fallthru
      _
    // Predicated region
    $region82: #{tpu_custom_call.1} parent=1 // pred_check
      _
    $region83: #{tpu_custom_call.1} parent=1 // pred_check_branch
      %695 = sbr.rel (0) target = $region85
    $region84: #{tpu_custom_call.1} parent=1 // pred_region
      %696 = dma.done [#allocation16], 128
    $region85: #{tpu_custom_call.1} parent=1 // pred_fallthru
      _
    %697 = vsyncpa [#allocation3], 1
    %698 = vsyncpa [#allocation6], 1
    %699 = vsyncpa [#allocation9], 1
    %700 = vsyncpa [#allocation12], 1
    %701 = vsyncpa [#allocation4], 1
    %702 = vsyncpa [#allocation16], 1

// kernel: tpu_custom_call.1
$region0: #{tpu_custom_call.1}
  #allocation0 [shape = 'u32[]', space=smem, size = 0x4, offset = 0x4, fixed_abs, tag = 'smem constant byte address 0x4 - core index']
  #allocation1 [shape = 'u32[144,128]{1,0:T(1,128)}', space=vmem, size = 0x12000, scoped, tag = 'internal scratch']
  %s0 = inlined_call_operand.hbm [shape: bf16[8,256], index: 0, kind: input, shape index: {}]
  %s1 = inlined_call_operand.hbm [shape: bf16[256,128], index: 1, kind: input, shape index: {}]
  %s2 = inlined_call_operand.hbm [shape: f32[1,128], index: 2, kind: input, shape index: {}]
  %s3 = inlined_call_operand.hbm [shape: bf16[128,128], index: 3, kind: input, shape index: {}]
  %s4 = inlined_call_operand.hbm [shape: f32[1,128], index: 4, kind: input, shape index: {}]
  %s5 = inlined_call_operand.vmem [shape: f32[8,32], index: 5, kind: input, shape index: {}]
  %s6 = inlined_call_operand.hbm [shape: bf16[32,128], index: 6, kind: input, shape index: {}]
  %s7 = inlined_call_operand.vmem [shape: f32[1,128], index: 7, kind: input, shape index: {}]
  %s8 = inlined_call_operand.hbm [shape: bf16[128,256], index: 8, kind: input, shape index: {}]
  %s9 = inlined_call_operand.vmem [shape: f32[1,256], index: 9, kind: input, shape index: {}]
  %s10 = inlined_call_operand.hbm [shape: f32[8,256], index: 10, kind: output, shape index: {0}]
  %s11 = inlined_call_operand.hbm [shape: f32[8,128], index: 11, kind: output, shape index: {1}]
  %12 = xla_tuple %s10, %s11
  %s13 = sld [smem:[#allocation0]]
  $region86: #{tpu_custom_call.1} parent=0
    _
  %s15 = ssub.s32 1, %s13
  %s16 = scalar_select 0, %s15, %s13
  $region1: #{tpu_custom_call.1} parent=0
    #allocation2 [shape = 'u8[4096]{0}', space=vmem, size = 0x1000, scoped, tag = 'input window, operand 0, single buffered']
    #allocation3 [shape = 's32[1]{0}', space=sflag, size = 0x4, scoped, tag = 'scoped memory for tpu_custom_call.1']
    #allocation4 [shape = 's32[1]{0}', space=sflag, size = 0x4, scoped, tag = 'scoped memory for tpu_custom_call.1']
    #allocation5 [shape = 'u8[65536]{0}', space=vmem, size = 0x10000, scoped, tag = 'input window, operand 1, single buffered']
    #allocation6 [shape = 's32[1]{0}', space=sflag, size = 0x4, scoped, tag = 'scoped memory for tpu_custom_call.1']
    #allocation7 [shape = 'u8[512]{0}', space=vmem, size = 0x400, scoped, tag = 'input window, operand 2, single buffered']
    #allocation8 [shape = 'u8[32768]{0}', space=vmem, size = 0x8000, scoped, tag = 'input window, operand 3, single buffered']
    #allocation9 [shape = 's32[1]{0}', space=sflag, size = 0x4, scoped, tag = 'scoped memory for tpu_custom_call.1']
    #allocation10 [shape = 'u8[512]{0}', space=vmem, size = 0x400, scoped, tag = 'input window, operand 4, single buffered']
    #allocation11 [shape = 'u8[8192]{0}', space=vmem, size = 0x2000, scoped, tag = 'input window, operand 6, single buffered']
    #allocation12 [shape = 's32[1]{0}', space=sflag, size = 0x4, scoped, tag = 'scoped memory for tpu_custom_call.1']
    #allocation13 [shape = 'u8[65536]{0}', space=vmem, size = 0x10000, scoped, tag = 'input window, operand 8, single buffered']
    #allocation14 [shape = 'u8[8192]{0}', space=vmem, size = 0x2000, scoped, tag = 'output window, operand 0, single buffered']
    #allocation15 [shape = 'u8[4096]{0}', space=vmem, size = 0x1000, scoped, tag = 'output window, operand 1, single buffered']
    #allocation16 [shape = 's32[1]{0}', space=sflag, size = 0x4, scoped, tag = 'scoped memory for tpu_custom_call.1']
    %17 = vsyncpa [#allocation3], 0
    %18 = vsyncpa [#allocation6], 0
    %19 = vsyncpa [#allocation9], 0
    %20 = vsyncpa [#allocation12], 0
    %21 = vsyncpa [#allocation4], 0
    %22 = vsyncpa [#allocation16], 0
    // Predicated region
    $region2: #{tpu_custom_call.1} parent=1 // pred_check
      _
    $region3: #{tpu_custom_call.1} parent=1 // pred_check_branch
      %24 = sbr.rel (0) target = $region5
    $region4: #{tpu_custom_call.1} parent=1 // pred_region
      %s26 = ssub.s32 128, 128
      %27 = vsyncadd [#allocation3], %s26
      %s29 = sshll.u32 [#allocation2], 4
      %s30 = int_to_ptr.vmem [resolvable:$true] %s29
      %32 = dma.hbm_to_vmem [thread:$0]  %s0, 128, %s30, [#allocation3]
    $region5: #{tpu_custom_call.1} parent=1 // pred_fallthru
      _
    // Predicated region
    $region6: #{tpu_custom_call.1} parent=1 // pred_check
      _
    $region7: #{tpu_custom_call.1} parent=1 // pred_check_branch
      %34 = sbr.rel (0) target = $region9
    $region8: #{tpu_custom_call.1} parent=1 // pred_region
      %s36 = ssub.s32 2048, 2048
      %37 = vsyncadd [#allocation6], %s36
      %s38 = sshll.u32 [#allocation5], 4
      %s39 = int_to_ptr.vmem [resolvable:$true] %s38
      %44 = dma.hbm_to_vmem [thread:$0]  %s1, 2048, %s39, [#allocation6], 64, 64, 4
    $region9: #{tpu_custom_call.1} parent=1 // pred_fallthru
      _
    // Predicated region
    $region10: #{tpu_custom_call.1} parent=1 // pred_check
      _
    $region11: #{tpu_custom_call.1} parent=1 // pred_check_branch
      %46 = sbr.rel (0) target = $region13
    $region12: #{tpu_custom_call.1} parent=1 // pred_region
      %s48 = ssub.s32 16, 16
      %49 = vsyncadd [#allocation6], %s48
      %s51 = sshll.u32 [#allocation7], 4
      %s52 = int_to_ptr.vmem [resolvable:$true] %s51
      %54 = dma.hbm_to_vmem [thread:$0]  %s2, 16, %s52, [#allocation6]
    $region13: #{tpu_custom_call.1} parent=1 // pred_fallthru
      _
    // Predicated region
    $region14: #{tpu_custom_call.1} parent=1 // pred_check
      _
    $region15: #{tpu_custom_call.1} parent=1 // pred_check_branch
      %56 = sbr.rel (0) target = $region17
    $region16: #{tpu_custom_call.1} parent=1 // pred_region
      %s58 = ssub.s32 1024, 1024
      %59 = vsyncadd [#allocation9], %s58
      %s60 = sshll.u32 [#allocation8], 4
      %s61 = int_to_ptr.vmem [resolvable:$true] %s60
      %66 = dma.hbm_to_vmem [thread:$0]  %s3, 1024, %s61, [#allocation9], 64, 64, 4
    $region17: #{tpu_custom_call.1} parent=1 // pred_fallthru
      _
    // Predicated region
    $region18: #{tpu_custom_call.1} parent=1 // pred_check
      _
    $region19: #{tpu_custom_call.1} parent=1 // pred_check_branch
      %68 = sbr.rel (0) target = $region21
    $region20: #{tpu_custom_call.1} parent=1 // pred_region
      %s70 = ssub.s32 16, 16
      %71 = vsyncadd [#allocation9], %s70
      %s73 = sshll.u32 [#allocation10], 4
      %s74 = int_to_ptr.vmem [resolvable:$true] %s73
      %76 = dma.hbm_to_vmem [thread:$0]  %s4, 16, %s74, [#allocation9]
    $region21: #{tpu_custom_call.1} parent=1 // pred_fallthru
      _
    // Predicated region
    $region22: #{tpu_custom_call.1} parent=1 // pred_check
      _
    $region23: #{tpu_custom_call.1} parent=1 // pred_check_branch
      %78 = sbr.rel (0) target = $region25
    $region24: #{tpu_custom_call.1} parent=1 // pred_region
      _
    $region25: #{tpu_custom_call.1} parent=1 // pred_fallthru
      _
    // Predicated region
    $region26: #{tpu_custom_call.1} parent=1 // pred_check
      _
    $region27: #{tpu_custom_call.1} parent=1 // pred_check_branch
      %80 = sbr.rel (0) target = $region29
    $region28: #{tpu_custom_call.1} parent=1 // pred_region
      %s82 = ssub.s32 256, 256
      %83 = vsyncadd [#allocation12], %s82
      %s84 = sshll.u32 [#allocation11], 4
      %s85 = int_to_ptr.vmem [resolvable:$true] %s84
      %90 = dma.hbm_to_vmem [thread:$0]  %s6, 256, %s85, [#allocation12], 64, 64, 4
    $region29: #{tpu_custom_call.1} parent=1 // pred_fallthru
      _
    // Predicated region
    $region30: #{tpu_custom_call.1} parent=1 // pred_check
      _
    $region31: #{tpu_custom_call.1} parent=1 // pred_check_branch
      %92 = sbr.rel (0) target = $region33
    $region32: #{tpu_custom_call.1} parent=1 // pred_region
      _
    $region33: #{tpu_custom_call.1} parent=1 // pred_fallthru
      _
    // Predicated region
    $region34: #{tpu_custom_call.1} parent=1 // pred_check
      _
    $region35: #{tpu_custom_call.1} parent=1 // pred_check_branch
      %94 = sbr.rel (0) target = $region37
    $region36: #{tpu_custom_call.1} parent=1 // pred_region
      %s96 = ssub.s32 2048, 2048
      %97 = vsyncadd [#allocation12], %s96
      %s98 = sshll.u32 [#allocation13], 4
      %s99 = int_to_ptr.vmem [resolvable:$true] %s98
      %104 = dma.hbm_to_vmem [thread:$0]  %s8, 2048, %s99, [#allocation12], 128, 128, 8
    $region37: #{tpu_custom_call.1} parent=1 // pred_fallthru
      _
    // Predicated region
    $region38: #{tpu_custom_call.1} parent=1 // pred_check
      _
    $region39: #{tpu_custom_call.1} parent=1 // pred_check_branch
      %106 = sbr.rel (0) target = $region41
    $region40: #{tpu_custom_call.1} parent=1 // pred_region
      _
    $region41: #{tpu_custom_call.1} parent=1 // pred_fallthru
      _
    // Predicated region
    $region42: #{tpu_custom_call.1} parent=1 // pred_check
      _
    $region43: #{tpu_custom_call.1} parent=1 // pred_check_branch
      %108 = sbr.rel (0) target = $region45
    $region44: #{tpu_custom_call.1} parent=1 // pred_region
      %109 = dma.done [#allocation3], 128
    $region45: #{tpu_custom_call.1} parent=1 // pred_fallthru
      _
    // Predicated region
    $region46: #{tpu_custom_call.1} parent=1 // pred_check
      _
    $region47: #{tpu_custom_call.1} parent=1 // pred_check_branch
      %111 = sbr.rel (0) target = $region49
    $region48: #{tpu_custom_call.1} parent=1 // pred_region
      %112 = dma.done [#allocation6], 2048
    $region49: #{tpu_custom_call.1} parent=1 // pred_fallthru
      _
    // Predicated region
    $region50: #{tpu_custom_call.1} parent=1 // pred_check
      _
    $region51: #{tpu_custom_call.1} parent=1 // pred_check_branch
      %114 = sbr.rel (0) target = $region53
    $region52: #{tpu_custom_call.1} parent=1 // pred_region
      %115 = dma.done [#allocation6], 16
    $region53: #{tpu_custom_call.1} parent=1 // pred_fallthru
      _
    // Predicated region
    $region54: #{tpu_custom_call.1} parent=1 // pred_check
      _
    $region55: #{tpu_custom_call.1} parent=1 // pred_check_branch
      %117 = sbr.rel (0) target = $region57
    $region56: #{tpu_custom_call.1} parent=1 // pred_region
      %118 = dma.done [#allocation9], 1024
    $region57: #{tpu_custom_call.1} parent=1 // pred_fallthru
      _
    // Predicated region
    $region58: #{tpu_custom_call.1} parent=1 // pred_check
      _
    $region59: #{tpu_custom_call.1} parent=1 // pred_check_branch
      %120 = sbr.rel (0) target = $region61
    $region60: #{tpu_custom_call.1} parent=1 // pred_region
      %121 = dma.done [#allocation9], 16
    $region61: #{tpu_custom_call.1} parent=1 // pred_fallthru
      _
    // Predicated region
    $region62: #{tpu_custom_call.1} parent=1 // pred_check
      _
    $region63: #{tpu_custom_call.1} parent=1 // pred_check_branch
      %123 = sbr.rel (0) target = $region65
    $region64: #{tpu_custom_call.1} parent=1 // pred_region
      %124 = dma.done [#allocation12], 256
    $region65: #{tpu_custom_call.1} parent=1 // pred_fallthru
      _
    // Predicated region
    $region66: #{tpu_custom_call.1} parent=1 // pred_check
      _
    $region67: #{tpu_custom_call.1} parent=1 // pred_check_branch
      %126 = sbr.rel (0) target = $region69
    $region68: #{tpu_custom_call.1} parent=1 // pred_region
      %127 = dma.done [#allocation12], 2048
    $region69: #{tpu_custom_call.1} parent=1 // pred_fallthru
      _
    %v129 = vld [vmem:[#allocation2] sm:$0xff]
    %v130 = vld [vmem:[#allocation5] sm:$0xf]
    %v131 = vld [vmem:[#allocation5 + $0x4] sm:$0xf]
    %v132 = vld [vmem:[#allocation5 + $0x8] sm:$0xf]
    %v133 = vld [vmem:[#allocation5 + $0xc] sm:$0xf]
    %v134 = vld [vmem:[#allocation5 + $0x10] sm:$0xf]
    %v135 = vld [vmem:[#allocation5 + $0x14] sm:$0xf]
    %v136 = vld [vmem:[#allocation5 + $0x18] sm:$0xf]
    %v137 = vld [vmem:[#allocation5 + $0x1c] sm:$0xf]
    %v138 = vld [vmem:[#allocation5 + $0x20] sm:$0xf]
    %v139 = vld [vmem:[#allocation5 + $0x24] sm:$0xf]
    %v140 = vld [vmem:[#allocation5 + $0x28] sm:$0xf]
    %v141 = vld [vmem:[#allocation5 + $0x2c] sm:$0xf]
    %v142 = vld [vmem:[#allocation5 + $0x30] sm:$0xf]
    %v143 = vld [vmem:[#allocation5 + $0x34] sm:$0xf]
    %v144 = vld [vmem:[#allocation5 + $0x38] sm:$0xf]
    %v145 = vld [vmem:[#allocation5 + $0x3c] sm:$0xf]
    %v146 = vld [vmem:[#allocation5 + $0x40] sm:$0xf]
    %v147 = vld [vmem:[#allocation5 + $0x44] sm:$0xf]
    %v148 = vld [vmem:[#allocation5 + $0x48] sm:$0xf]
    %v149 = vld [vmem:[#allocation5 + $0x4c] sm:$0xf]
    %v150 = vld [vmem:[#allocation5 + $0x50] sm:$0xf]
    %v151 = vld [vmem:[#allocation5 + $0x54] sm:$0xf]
    %v152 = vld [vmem:[#allocation5 + $0x58] sm:$0xf]
    %v153 = vld [vmem:[#allocation5 + $0x5c] sm:$0xf]
    %v154 = vld [vmem:[#allocation5 + $0x60] sm:$0xf]
    %v155 = vld [vmem:[#allocation5 + $0x64] sm:$0xf]
    %v156 = vld [vmem:[#allocation5 + $0x68] sm:$0xf]
    %v157 = vld [vmem:[#allocation5 + $0x6c] sm:$0xf]
    %v158 = vld [vmem:[#allocation5 + $0x70] sm:$0xf]
    %v159 = vld [vmem:[#allocation5 + $0x74] sm:$0xf]
    %v160 = vld [vmem:[#allocation5 + $0x78] sm:$0xf]
    %v161 = vld [vmem:[#allocation5 + $0x7c] sm:$0xf]
    %v162 = vld [vmem:[#allocation7] sm:$0x1]
    %v164 = vlaneseq
    %v165 = vshrl.u32 %v164, 7
    %v166 = vsub.s32 0, %v165
    %v167 = vrot.slane %v162, %v166
    %v170 = vunpack.c.l.b16 %v129
    %v171 = vunpack.c.h.b16 %v129
    %v172 = vpack.c.b16 %v170, %v170
    %v173 = vpack.c.b16 %v171, %v171
    %v208 = vunpack.c.l.b16 %v130
    %v209 = vunpack.c.l.b16 %v131
    %v210 = vunpack.c.l.b16 %v132
    %v211 = vunpack.c.l.b16 %v133
    %v212 = vunpack.c.l.b16 %v134
    %v213 = vunpack.c.l.b16 %v135
    %v214 = vunpack.c.l.b16 %v136
    %v215 = vunpack.c.l.b16 %v137
    %v216 = vunpack.c.l.b16 %v138
    %v217 = vunpack.c.l.b16 %v139
    %v218 = vunpack.c.l.b16 %v140
    %v219 = vunpack.c.l.b16 %v141
    %v220 = vunpack.c.l.b16 %v142
    %v221 = vunpack.c.l.b16 %v143
    %v222 = vunpack.c.l.b16 %v144
    %v223 = vunpack.c.l.b16 %v145
    %v224 = vunpack.c.l.b16 %v146
    %v225 = vunpack.c.l.b16 %v147
    %v226 = vunpack.c.l.b16 %v148
    %v227 = vunpack.c.l.b16 %v149
    %v228 = vunpack.c.l.b16 %v150
    %v229 = vunpack.c.l.b16 %v151
    %v230 = vunpack.c.l.b16 %v152
    %v231 = vunpack.c.l.b16 %v153
    %v232 = vunpack.c.l.b16 %v154
    %v233 = vunpack.c.l.b16 %v155
    %v234 = vunpack.c.l.b16 %v156
    %v235 = vunpack.c.l.b16 %v157
    %v236 = vunpack.c.l.b16 %v158
    %v237 = vunpack.c.l.b16 %v159
    %v238 = vunpack.c.l.b16 %v160
    %v239 = vunpack.c.l.b16 %v161
    %v240 = vpack.c.b16 %v209, %v208
    %v241 = vpack.c.b16 %v211, %v210
    %v242 = vpack.c.b16 %v213, %v212
    %v243 = vpack.c.b16 %v215, %v214
    %v244 = vpack.c.b16 %v217, %v216
    %v245 = vpack.c.b16 %v219, %v218
    %v246 = vpack.c.b16 %v221, %v220
    %v247 = vpack.c.b16 %v223, %v222
    %v248 = vpack.c.b16 %v225, %v224
    %v249 = vpack.c.b16 %v227, %v226
    %v250 = vpack.c.b16 %v229, %v228
    %v251 = vpack.c.b16 %v231, %v230
    %v252 = vpack.c.b16 %v233, %v232
    %v253 = vpack.c.b16 %v235, %v234
    %v254 = vpack.c.b16 %v237, %v236
    %v255 = vpack.c.b16 %v239, %v238
    %272 = vmatprep.subr.bf16.mxu0 0
    %273 = vmatpush1.bf16.msra.mxu0 %v247
    %274 = vmatprep.subr.bf16.mxu0 0
    %275 = vmatpush1.bf16.msra.mxu0 %v246
    %276 = vmatprep.subr.bf16.mxu0 0
    %277 = vmatpush1.bf16.msra.mxu0 %v245
    %278 = vmatprep.subr.bf16.mxu0 0
    %279 = vmatpush1.bf16.msra.mxu0 %v244
    %280 = vmatprep.subr.bf16.mxu0 0
    %281 = vmatpush1.bf16.msra.mxu0 %v243
    %282 = vmatprep.subr.bf16.mxu0 0
    %283 = vmatpush1.bf16.msra.mxu0 %v242
    %284 = vmatprep.subr.bf16.mxu0 0
    %285 = vmatpush1.bf16.msra.mxu0 %v241
    %286 = vmatprep.subr.bf16.mxu0 0
    %287 = vmatpush1.bf16.msra.mxu0 %v240
    %288 = vmatprep.subr.bf16.mxu0 0
    %289 = vmatpush2.bf16.msra.mxu0 %v255
    %290 = vmatprep.subr.bf16.mxu0 0
    %291 = vmatpush2.bf16.msra.mxu0 %v254
    %292 = vmatprep.subr.bf16.mxu0 0
    %293 = vmatpush2.bf16.msra.mxu0 %v253
    %294 = vmatprep.subr.bf16.mxu0 0
    %295 = vmatpush2.bf16.msra.mxu0 %v252
    %296 = vmatprep.subr.bf16.mxu0 0
    %297 = vmatpush2.bf16.msra.mxu0 %v251
    %298 = vmatprep.subr.bf16.mxu0 0
    %299 = vmatpush2.bf16.msra.mxu0 %v250
    %300 = vmatprep.subr.bf16.mxu0 0
    %301 = vmatpush2.bf16.msra.mxu0 %v249
    %302 = vmatprep.subr.bf16.mxu0 0
    %303 = vmatpush2.bf16.msra.mxu0 %v248
    %304 = vmatprep.mubr.bf16.mxu0 %v173
    %305 = vmatmul.mubr.bf16.gmra.mxu0 %v172
    %v306 = vpop.f32.mrf.mxu0
    %v307 = vadd.f32 %v167, %v306
    %v308 = vpop.f32.mrf.mxu0
    %v309 = vpop.f32.mrf.mxu0
    %v310 = vpop.f32.mrf.mxu0
    %311 = vdwg.mxu0
    %v312 = vmax.f32 %v307, 0.0
    %v313 = vpack.c.bf16 %v312, %v312
    %v314 = vld [vmem:[#allocation8] sm:$0xf]
    %v315 = vld [vmem:[#allocation8 + $0x4] sm:$0xf]
    %v316 = vld [vmem:[#allocation8 + $0x8] sm:$0xf]
    %v317 = vld [vmem:[#allocation8 + $0xc] sm:$0xf]
    %v318 = vld [vmem:[#allocation8 + $0x10] sm:$0xf]
    %v319 = vld [vmem:[#allocation8 + $0x14] sm:$0xf]
    %v320 = vld [vmem:[#allocation8 + $0x18] sm:$0xf]
    %v321 = vld [vmem:[#allocation8 + $0x1c] sm:$0xf]
    %v322 = vld [vmem:[#allocation8 + $0x20] sm:$0xf]
    %v323 = vld [vmem:[#allocation8 + $0x24] sm:$0xf]
    %v324 = vld [vmem:[#allocation8 + $0x28] sm:$0xf]
    %v325 = vld [vmem:[#allocation8 + $0x2c] sm:$0xf]
    %v326 = vld [vmem:[#allocation8 + $0x30] sm:$0xf]
    %v327 = vld [vmem:[#allocation8 + $0x34] sm:$0xf]
    %v328 = vld [vmem:[#allocation8 + $0x38] sm:$0xf]
    %v329 = vld [vmem:[#allocation8 + $0x3c] sm:$0xf]
    %v330 = vld [vmem:[#allocation10] sm:$0x1]
    %v332 = vlaneseq
    %v333 = vshrl.u32 %v332, 7
    %v334 = vsub.s32 0, %v333
    %v335 = vrot.slane %v330, %v334
    %v353 = vunpack.c.l.b16 %v314
    %v354 = vunpack.c.l.b16 %v315
    %v355 = vunpack.c.l.b16 %v316
    %v356 = vunpack.c.l.b16 %v317
    %v357 = vunpack.c.l.b16 %v318
    %v358 = vunpack.c.l.b16 %v319
    %v359 = vunpack.c.l.b16 %v320
    %v360 = vunpack.c.l.b16 %v321
    %v361 = vunpack.c.l.b16 %v322
    %v362 = vunpack.c.l.b16 %v323
    %v363 = vunpack.c.l.b16 %v324
    %v364 = vunpack.c.l.b16 %v325
    %v365 = vunpack.c.l.b16 %v326
    %v366 = vunpack.c.l.b16 %v327
    %v367 = vunpack.c.l.b16 %v328
    %v368 = vunpack.c.l.b16 %v329
    %v369 = vpack.c.b16 %v354, %v353
    %v370 = vpack.c.b16 %v356, %v355
    %v371 = vpack.c.b16 %v358, %v357
    %v372 = vpack.c.b16 %v360, %v359
    %v373 = vpack.c.b16 %v362, %v361
    %v374 = vpack.c.b16 %v364, %v363
    %v375 = vpack.c.b16 %v366, %v365
    %v376 = vpack.c.b16 %v368, %v367
    %385 = vmatprep.subr.bf16.mxu0 0
    %386 = vmatpush1.bf16.msra.mxu0 %v376
    %387 = vmatprep.subr.bf16.mxu0 0
    %388 = vmatpush1.bf16.msra.mxu0 %v375
    %389 = vmatprep.subr.bf16.mxu0 0
    %390 = vmatpush1.bf16.msra.mxu0 %v374
    %391 = vmatprep.subr.bf16.mxu0 0
    %392 = vmatpush1.bf16.msra.mxu0 %v373
    %393 = vmatprep.subr.bf16.mxu0 0
    %394 = vmatpush1.bf16.msra.mxu0 %v372
    %395 = vmatprep.subr.bf16.mxu0 0
    %396 = vmatpush1.bf16.msra.mxu0 %v371
    %397 = vmatprep.subr.bf16.mxu0 0
    %398 = vmatpush1.bf16.msra.mxu0 %v370
    %399 = vmatprep.subr.bf16.mxu0 0
    %400 = vmatpush1.bf16.msra.mxu0 %v369
    %401 = vmatprep.subr.bf16.mxu0 0
    %402 = vmatpush2.bf16.msra.mxu0 0
    %403 = vmatprep.subr.bf16.mxu0 0
    %404 = vmatpush2.bf16.msra.mxu0 0
    %405 = vmatprep.subr.bf16.mxu0 0
    %406 = vmatpush2.bf16.msra.mxu0 0
    %407 = vmatprep.subr.bf16.mxu0 0
    %408 = vmatpush2.bf16.msra.mxu0 0
    %409 = vmatprep.subr.bf16.mxu0 0
    %410 = vmatpush2.bf16.msra.mxu0 0
    %411 = vmatprep.subr.bf16.mxu0 0
    %412 = vmatpush2.bf16.msra.mxu0 0
    %413 = vmatprep.subr.bf16.mxu0 0
    %414 = vmatpush2.bf16.msra.mxu0 0
    %415 = vmatprep.subr.bf16.mxu0 0
    %416 = vmatpush2.bf16.msra.mxu0 0
    %417 = vmatprep.mubr.bf16.mxu0 0
    %418 = vmatmul.mubr.bf16.gmra.mxu0 %v313
    %v419 = vpop.f32.mrf.mxu0
    %v420 = vadd.f32 %v335, %v419
    %v421 = vpop.f32.mrf.mxu0
    %v422 = vpop.f32.mrf.mxu0
    %v423 = vpop.f32.mrf.mxu0
    %424 = vdwg.mxu0
    %v425 = vmul.f32 %v420, 0.5
    %v426 = vmul.f32 %v425, 1.442695
    %v427 = vpow.pop %v426
    %v428 = vld [vmem:[%s5] sm:$0xff]
    %430 = vrot.lane.b32.xlu0 %v428, 32
    %v431 = vpop.permute.xlu0 %430
    %v433 = vmul.f32 %v427, %v431
    %435 = vrot.lane.b32.xlu0 %v433, 96
    %v436 = vpop.permute.xlu0 %435
    %v438 = vadd.f32 %v420, %v436
    %v439 = vpack.c.bf16 %v438, %v438
    %v440 = vld [vmem:[#allocation11] sm:$0xf]
    %v441 = vld [vmem:[#allocation11 + $0x4] sm:$0xf]
    %v442 = vld [vmem:[#allocation11 + $0x8] sm:$0xf]
    %v443 = vld [vmem:[#allocation11 + $0xc] sm:$0xf]
    %v444 = vld [vmem:[%s7] sm:$0x1]
    %v446 = vlaneseq
    %v447 = vshrl.u32 %v446, 7
    %v448 = vsub.s32 0, %v447
    %v449 = vrot.slane %v444, %v448
    %v455 = vunpack.c.l.b16 %v440
    %v456 = vunpack.c.l.b16 %v441
    %v457 = vunpack.c.l.b16 %v442
    %v458 = vunpack.c.l.b16 %v443
    %v459 = vpack.c.b16 %v456, %v455
    %v460 = vpack.c.b16 %v458, %v457
    %vm463 = vcmask 261120
    %v465 = vsel %vm463, %v439, 0
    %467 = vmatprep.subr.bf16.mxu0 0
    %468 = vmatpush1.bf16.msra.mxu0 0
    %469 = vmatprep.subr.bf16.mxu0 0
    %470 = vmatpush1.bf16.msra.mxu0 0
    %471 = vmatprep.subr.bf16.mxu0 0
    %472 = vmatpush1.bf16.msra.mxu0 0
    %473 = vmatprep.subr.bf16.mxu0 0
    %474 = vmatpush1.bf16.msra.mxu0 0
    %475 = vmatprep.subr.bf16.mxu0 0
    %476 = vmatpush1.bf16.msra.mxu0 0
    %477 = vmatprep.subr.bf16.mxu0 0
    %478 = vmatpush1.bf16.msra.mxu0 0
    %479 = vmatprep.subr.bf16.mxu0 0
    %480 = vmatpush1.bf16.msra.mxu0 %v460
    %481 = vmatprep.subr.bf16.mxu0 0
    %482 = vmatpush1.bf16.msra.mxu0 %v459
    %483 = vmatprep.subr.bf16.mxu0 0
    %484 = vmatpush2.bf16.msra.mxu0 0
    %485 = vmatprep.subr.bf16.mxu0 0
    %486 = vmatpush2.bf16.msra.mxu0 0
    %487 = vmatprep.subr.bf16.mxu0 0
    %488 = vmatpush2.bf16.msra.mxu0 0
    %489 = vmatprep.subr.bf16.mxu0 0
    %490 = vmatpush2.bf16.msra.mxu0 0
    %491 = vmatprep.subr.bf16.mxu0 0
    %492 = vmatpush2.bf16.msra.mxu0 0
    %493 = vmatprep.subr.bf16.mxu0 0
    %494 = vmatpush2.bf16.msra.mxu0 0
    %495 = vmatprep.subr.bf16.mxu0 0
    %496 = vmatpush2.bf16.msra.mxu0 0
    %497 = vmatprep.subr.bf16.mxu0 0
    %498 = vmatpush2.bf16.msra.mxu0 0
    %499 = vmatprep.mubr.bf16.mxu0 0
    %500 = vmatmul.mubr.bf16.gmra.mxu0 %v465
    %v501 = vpop.f32.mrf.mxu0
    %v502 = vadd.f32 %v449, %v501
    %v503 = vpop.f32.mrf.mxu0
    %v504 = vpop.f32.mrf.mxu0
    %v505 = vpop.f32.mrf.mxu0
    %506 = vdwg.mxu0
    %v507 = vmax.f32 %v502, 0.0
    %v508 = vpack.c.bf16 %v507, %v507
    %v509 = vld [vmem:[#allocation13] sm:$0xff]
    %v510 = vld [vmem:[#allocation13 + $0x8] sm:$0xff]
    %v511 = vld [vmem:[#allocation13 + $0x10] sm:$0xff]
    %v512 = vld [vmem:[#allocation13 + $0x18] sm:$0xff]
    %v513 = vld [vmem:[#allocation13 + $0x20] sm:$0xff]
    %v514 = vld [vmem:[#allocation13 + $0x28] sm:$0xff]
    %v515 = vld [vmem:[#allocation13 + $0x30] sm:$0xff]
    %v516 = vld [vmem:[#allocation13 + $0x38] sm:$0xff]
    %v517 = vld [vmem:[#allocation13 + $0x40] sm:$0xff]
    %v518 = vld [vmem:[#allocation13 + $0x48] sm:$0xff]
    %v519 = vld [vmem:[#allocation13 + $0x50] sm:$0xff]
    %v520 = vld [vmem:[#allocation13 + $0x58] sm:$0xff]
    %v521 = vld [vmem:[#allocation13 + $0x60] sm:$0xff]
    %v522 = vld [vmem:[#allocation13 + $0x68] sm:$0xff]
    %v523 = vld [vmem:[#allocation13 + $0x70] sm:$0xff]
    %v524 = vld [vmem:[#allocation13 + $0x78] sm:$0xff]
    %v525 = vld [vmem:[%s9] sm:$0x3]
    %v527 = vlaneseq
    %v528 = vshrl.u32 %v527, 7
    %v529 = vsub.s32 0, %v528
    %v530 = vrot.slane %v525, %v529
    %v531 = vlaneseq
    %v532 = vshrl.u32 %v531, 7
    %v533 = vsub.s32 1, %v532
    %v534 = vrot.slane %v525, %v533
    %v553 = vunpack.c.l.b16 %v509
    %v554 = vunpack.c.h.b16 %v509
    %v555 = vunpack.c.l.b16 %v510
    %v556 = vunpack.c.h.b16 %v510
    %v557 = vunpack.c.l.b16 %v511
    %v558 = vunpack.c.h.b16 %v511
    %v559 = vunpack.c.l.b16 %v512
    %v560 = vunpack.c.h.b16 %v512
    %v561 = vunpack.c.l.b16 %v513
    %v562 = vunpack.c.h.b16 %v513
    %v563 = vunpack.c.l.b16 %v514
    %v564 = vunpack.c.h.b16 %v514
    %v565 = vunpack.c.l.b16 %v515
    %v566 = vunpack.c.h.b16 %v515
    %v567 = vunpack.c.l.b16 %v516
    %v568 = vunpack.c.h.b16 %v516
    %v569 = vunpack.c.l.b16 %v517
    %v570 = vunpack.c.h.b16 %v517
    %v571 = vunpack.c.l.b16 %v518
    %v572 = vunpack.c.h.b16 %v518
    %v573 = vunpack.c.l.b16 %v519
    %v574 = vunpack.c.h.b16 %v519
    %v575 = vunpack.c.l.b16 %v520
    %v576 = vunpack.c.h.b16 %v520
    %v577 = vunpack.c.l.b16 %v521
    %v578 = vunpack.c.h.b16 %v521
    %v579 = vunpack.c.l.b16 %v522
    %v580 = vunpack.c.h.b16 %v522
    %v581 = vunpack.c.l.b16 %v523
    %v582 = vunpack.c.h.b16 %v523
    %v583 = vunpack.c.l.b16 %v524
    %v584 = vunpack.c.h.b16 %v524
    %v585 = vpack.c.b16 %v555, %v553
    %v586 = vpack.c.b16 %v556, %v554
    %v587 = vpack.c.b16 %v559, %v557
    %v588 = vpack.c.b16 %v560, %v558
    %v589 = vpack.c.b16 %v563, %v561
    %v590 = vpack.c.b16 %v564, %v562
    %v591 = vpack.c.b16 %v567, %v565
    %v592 = vpack.c.b16 %v568, %v566
    %v593 = vpack.c.b16 %v571, %v569
    %v594 = vpack.c.b16 %v572, %v570
    %v595 = vpack.c.b16 %v575, %v573
    %v596 = vpack.c.b16 %v576, %v574
    %v597 = vpack.c.b16 %v579, %v577
    %v598 = vpack.c.b16 %v580, %v578
    %v599 = vpack.c.b16 %v583, %v581
    %v600 = vpack.c.b16 %v584, %v582
    %617 = vmatprep.subr.bf16.mxu0 %v600
    %618 = vmatpush1.bf16.msra.mxu0 %v599
    %619 = vmatprep.subr.bf16.mxu0 %v598
    %620 = vmatpush1.bf16.msra.mxu0 %v597
    %621 = vmatprep.subr.bf16.mxu0 %v596
    %622 = vmatpush1.bf16.msra.mxu0 %v595
    %623 = vmatprep.subr.bf16.mxu0 %v594
    %624 = vmatpush1.bf16.msra.mxu0 %v593
    %625 = vmatprep.subr.bf16.mxu0 %v592
    %626 = vmatpush1.bf16.msra.mxu0 %v591
    %627 = vmatprep.subr.bf16.mxu0 %v590
    %628 = vmatpush1.bf16.msra.mxu0 %v589
    %629 = vmatprep.subr.bf16.mxu0 %v588
    %630 = vmatpush1.bf16.msra.mxu0 %v587
    %631 = vmatprep.subr.bf16.mxu0 %v586
    %632 = vmatpush1.bf16.msra.mxu0 %v585
    %633 = vmatprep.subr.bf16.mxu0 0
    %634 = vmatpush2.bf16.msra.mxu0 0
    %635 = vmatprep.subr.bf16.mxu0 0
    %636 = vmatpush2.bf16.msra.mxu0 0
    %637 = vmatprep.subr.bf16.mxu0 0
    %638 = vmatpush2.bf16.msra.mxu0 0
    %639 = vmatprep.subr.bf16.mxu0 0
    %640 = vmatpush2.bf16.msra.mxu0 0
    %641 = vmatprep.subr.bf16.mxu0 0
    %642 = vmatpush2.bf16.msra.mxu0 0
    %643 = vmatprep.subr.bf16.mxu0 0
    %644 = vmatpush2.bf16.msra.mxu0 0
    %645 = vmatprep.subr.bf16.mxu0 0
    %646 = vmatpush2.bf16.msra.mxu0 0
    %647 = vmatprep.subr.bf16.mxu0 0
    %648 = vmatpush2.bf16.msra.mxu0 0
    %649 = vmatprep.mubr.bf16.mxu0 0
    %650 = vmatmul.mubr.bf16.gmra.mxu0 %v508
    %v651 = vpop.f32.mrf.mxu0
    %v652 = vadd.f32 %v530, %v651
    %v653 = vpop.f32.mrf.mxu0
    %v654 = vadd.f32 %v534, %v653
    %v655 = vpop.f32.mrf.mxu0
    %v656 = vpop.f32.mrf.mxu0
    %657 = vdwg.mxu0
    %v658 = vsub.f32 0.0, %v652
    %v659 = vsub.f32 0.0, %v654
    %v660 = vmul.f32 %v658, 1.442695
    %v661 = vpow.pop %v660
    %v662 = vmul.f32 %v659, 1.442695
    %v663 = vpow.pop %v662
    %v664 = vadd.f32 %v661, 1.0
    %v665 = vadd.f32 %v663, 1.0
    %v666 = vrcp.pop %v664
    %v667 = vrcp.pop %v665
    %668 = vst [vmem:[#allocation14] sm:$0xff] %v666
    %669 = vst [vmem:[#allocation14 + $0x8] sm:$0xff] %v667
    %670 = vst [vmem:[#allocation15] sm:$0xff] %v420
    // Predicated region
    $region70: #{tpu_custom_call.1} parent=1 // pred_check
      _
    $region71: #{tpu_custom_call.1} parent=1 // pred_check_branch
      %672 = sbr.rel (0) target = $region73
    $region72: #{tpu_custom_call.1} parent=1 // pred_region
      %s674 = ssub.s32 256, 256
      %675 = vsyncadd [#allocation4], %s674
      %s677 = sshll.u32 [#allocation14], 4
      %s678 = int_to_ptr.vmem [resolvable:$true] %s677
      %680 = dma.vmem_to_hbm [thread:$0]  %s678, 256, %s10, [#allocation4]
    $region73: #{tpu_custom_call.1} parent=1 // pred_fallthru
      _
    // Predicated region
    $region74: #{tpu_custom_call.1} parent=1 // pred_check
      _
    $region75: #{tpu_custom_call.1} parent=1 // pred_check_branch
      %682 = sbr.rel (0) target = $region77
    $region76: #{tpu_custom_call.1} parent=1 // pred_region
      %s684 = ssub.s32 128, 128
      %685 = vsyncadd [#allocation16], %s684
      %s687 = sshll.u32 [#allocation15], 4
      %s688 = int_to_ptr.vmem [resolvable:$true] %s687
      %690 = dma.vmem_to_hbm [thread:$0]  %s688, 128, %s11, [#allocation16]
    $region77: #{tpu_custom_call.1} parent=1 // pred_fallthru
      _
    // Predicated region
    $region78: #{tpu_custom_call.1} parent=1 // pred_check
      _
    $region79: #{tpu_custom_call.1} parent=1 // pred_check_branch
      %692 = sbr.rel (0) target = $region81
    $region80: #{tpu_custom_call.1} parent=1 // pred_region
      %693 = dma.done [#allocation4], 256
    $region81: #{tpu_custom_call.1} parent=1 // pred_fallthru
      _
    // Predicated region
    $region82: #{tpu_custom_call.1} parent=1 // pred_check
      _
    $region83: #{tpu_custom_call.1} parent=1 // pred_check_branch
      %695 = sbr.rel (0) target = $region85
    $region84: #{tpu_custom_call.1} parent=1 // pred_region
      %696 = dma.done [#allocation16], 128
    $region85: #{tpu_custom_call.1} parent=1 // pred_fallthru
      _
    %697 = vsyncpa [#allocation3], 1
    %698 = vsyncpa [#allocation6], 1
    %699 = vsyncpa [#allocation9], 1
    %700 = vsyncpa [#allocation12], 1
    %701 = vsyncpa [#allocation4], 1
    %702 = vsyncpa [#allocation16], 1

</llo_original>
